<compile_context>
chip_gen: v5e
topology: v5e:2x2
jax: 0.10.0
libtpu: 0.0.40
codegen_flags: <defaults>
</compile_context>

<pallas_src>
import jax
import jax.numpy as jnp
from jax import lax
from jax.experimental import pallas as pl
from jax.experimental.pallas import tpu as pltpu

# ----------------------------- small, module-consistent config -----------------------------
IMG = 16          # image_size
PATCH = 8         # patch_size
CHANNELS = 3
DIM = 32          # embed dim (divisible by 4 for sincos, divisible by heads)
DEPTH = 2
HEADS = 4
HEAD_DIM = DIM // HEADS
MLP_RATIO = 4.0
HIDDEN = int(DIM * MLP_RATIO)     # 128 -> lane-dense MLP intermediate
NUM_CLASSES = 10
BATCH = 2
GRID_HW = IMG // PATCH            # 2
NUM_PATCHES = GRID_HW * GRID_HW   # 4
SEQ = NUM_PATCHES + 1             # 5 (cls token + patches)
M = BATCH * SEQ                   # 10 valid token rows
M_PAD = 16                        # token rows padded to a multiple of 8 sublanes
CPP = CHANNELS * PATCH * PATCH    # 192
EPS = 1e-5                        # nn.LayerNorm default eps
NEG_INF = -1e9                    # dtype-safe additive mask value
VEC_ROWS = 7                      # packed small-vector rows per layer

_VMEM = pl.BlockSpec(memory_space=pltpu.MemorySpace.VMEM)


# ----------------------------------- Pallas kernel -----------------------------------
def _layer_norm(v, w, b):
    # two-pass (centered) variance: numerically robust, same reduction count as one-pass.
    mu = jnp.mean(v, axis=-1, keepdims=True)
    d = v - mu
    var = jnp.mean(d * d, axis=-1, keepdims=True)
    return d * lax.rsqrt(var + EPS) * w + b


def vit_fused_kernel(
    patches_ref, base_ref, wpatch_ref, wqkv_ref, wproj_ref,
    w1_ref, w2_ref, headw_ref, vecs_ref, logits_ref,
):
    f32 = jnp.float32
    bf16 = jnp.bfloat16
    nt_dims = (((1,), (1,)), ((), ()))   # q @ k^T, contraction over last dim of both

    def vrow(r, width):                  # one packed (1, width) f32 vector (prefix lane slice)
        return vecs_ref[r:r + 1, 0:width]

    # Additive batch mask built in-kernel: 0 within an image, NEG_INF across images / to pads.
    # Pad rows get batch id -1, so valid rows never attend to them (see invariant at top).
    rows = lax.broadcasted_iota(jnp.int32, (M_PAD, M_PAD), 0)
    cols = lax.broadcasted_iota(jnp.int32, (M_PAD, M_PAD), 1)

    def batch_id(idx):
        bid = jnp.zeros_like(idx)
        for bb in range(1, BATCH):       # compares/adds only — no vector integer division
            bid = bid + (idx >= bb * SEQ).astype(jnp.int32)
        return jnp.where(idx < M, bid, -1)

    mask = jnp.where(batch_id(rows) == batch_id(cols), 0.0, NEG_INF).astype(f32)

    # patch embed (conv-as-matmul, bf16 operands) fused with conv-bias / cls-token / pos-embed
    # add.  pad & cls rows of `patches_ref` are zero; `base_ref` carries everything additive.
    x = jnp.dot(patches_ref[...], wpatch_ref[...], preferred_element_type=f32) + base_ref[...]

    # transformer blocks: weights are tiny, all resident in VMEM, fully unrolled.
    for l in range(DEPTH):
        r = l * VEC_ROWS
        ln1w, ln1b = vrow(r + 0, DIM), vrow(r + 1, DIM)
        ln2w, ln2b = vrow(r + 2, DIM), vrow(r + 3, DIM)
        bproj, b2 = vrow(r + 4, DIM), vrow(r + 5, DIM)
        b1 = vrow(r + 6, HIDDEN)

        # ---- attention ----
        xn = _layer_norm(x, ln1w, ln1b).astype(bf16)
        # one fused qkv matmul per layer; attention scale pre-folded into the q columns.
        qkv = jnp.dot(xn, wqkv_ref[l], preferred_element_type=f32).astype(bf16)  # (M_PAD, 3*DIM)
        outs = []
        for h in range(HEADS):
            q = qkv[:, h * HEAD_DIM:(h + 1) * HEAD_DIM]
            k = qkv[:, DIM + h * HEAD_DIM:DIM + (h + 1) * HEAD_DIM]
            v = qkv[:, 2 * DIM + h * HEAD_DIM:2 * DIM + (h + 1) * HEAD_DIM]
            s = lax.dot_general(q, k, nt_dims, preferred_element_type=f32) + mask
            s = s - jnp.max(s, axis=-1, keepdims=True)
            p = jnp.exp(s)
            p = p * pl.reciprocal(jnp.sum(p, axis=-1, keepdims=True), approx=True)
            outs.append(jnp.dot(p.astype(bf16), v, preferred_element_type=f32))
        # lane-concatenated head outputs -> single fused output projection + single residual add
        o = jnp.concatenate(outs, axis=-1).astype(bf16)                 # (M_PAD, DIM)
        x = x + jnp.dot(o, wproj_ref[l], preferred_element_type=f32) + bproj

        # ---- MLP ----
        xn2 = _layer_norm(x, ln2w, ln2b).astype(bf16)
        h1 = jnp.dot(xn2, w1_ref[l], preferred_element_type=f32) + b1
        # TODO(synk): nn.GELU defaults to the exact erf form; tanh approximation used here.
        h1 = jax.nn.gelu(h1, approximate=True).astype(bf16)
        x = x + jnp.dot(h1, w2_ref[l], preferred_element_type=f32) + b2

    # ---- final LayerNorm + head on ALL rows (same MXU cost), store only the cls rows ----
    nw = vrow(DEPTH * VEC_ROWS + 0, DIM)
    nb = vrow(DEPTH * VEC_ROWS + 1, DIM)
    hb = vrow(DEPTH * VEC_ROWS + 2, NUM_CLASSES)
    z = _layer_norm(x, nw, nb)
    logits_all = jnp.dot(z, headw_ref[...], preferred_element_type=f32) + hb   # (M_PAD, NC)
    for b in range(BATCH):
        logits_ref[b:b + 1, :] = logits_all[b * SEQ:b * SEQ + 1, :]


# ----------------------------------- host-side glue -----------------------------------
def extract_patches(x_nchw):
    """NCHW -> (B*num_patches, C*P*P); row order matches Conv2d(stride=P).flatten(2).T."""
    b, c, h, w = x_nchw.shape
    gh, gw = h // PATCH, w // PATCH
    p = x_nchw.reshape(b, c, gh, PATCH, gw, PATCH)
    p = p.transpose(0, 2, 4, 1, 3, 5)                  # (B, gh, gw, C, Ph, Pw)
    return p.reshape(b * gh * gw, c * PATCH * PATCH)


def build_2d_sincos_pos_embed(temperature=10000.0):
    grid_w = jnp.arange(GRID_HW, dtype=jnp.float32)
    grid_h = jnp.arange(GRID_HW, dtype=jnp.float32)
    gw_, gh_ = jnp.meshgrid(grid_w, grid_h, indexing="ij")   # matches torch.meshgrid default
    pos_dim = DIM // 4
    omega = jnp.arange(pos_dim, dtype=jnp.float32) / pos_dim
    omega = 1.0 / (temperature ** omega)
    out_w = gw_.flatten()[:, None] * omega[None, :]
    out_h = gh_.flatten()[:, None] * omega[None, :]
    pe = jnp.concatenate(
        [jnp.sin(out_w), jnp.cos(out_w), jnp.sin(out_h), jnp.cos(out_h)], axis=1
    )
    pe = jnp.concatenate([jnp.zeros((1, DIM), jnp.float32), pe], axis=0)  # cls-token slot
    return pe[None]                                                        # (1, SEQ, DIM)


def init_params(key):
    ks = jax.random.split(key, 10)
    std = 0.02
    return {
        "w_patch": std * jax.random.normal(ks[0], (CPP, DIM), jnp.float32),
        "b_patch": jnp.zeros((1, DIM), jnp.float32),
        "cls_token": std * jax.random.normal(ks[1], (1, 1, DIM), jnp.float32),
        "pos_embed": build_2d_sincos_pos_embed(),
        "ln1_w": jnp.ones((DEPTH, 1, DIM), jnp.float32),
        "ln1_b": jnp.zeros((DEPTH, 1, DIM), jnp.float32),
        "wq": std * jax.random.normal(ks[2], (DEPTH, DIM, DIM), jnp.float32),   # qkv_bias=False
        "wk": std * jax.random.normal(ks[3], (DEPTH, DIM, DIM), jnp.float32),
        "wv": std * jax.random.normal(ks[4], (DEPTH, DIM, DIM), jnp.float32),
        "wproj": std * jax.random.normal(ks[5], (DEPTH, DIM, DIM), jnp.float32),
        "bproj": jnp.zeros((DEPTH, 1, DIM), jnp.float32),
        "ln2_w": jnp.ones((DEPTH, 1, DIM), jnp.float32),
        "ln2_b": jnp.zeros((DEPTH, 1, DIM), jnp.float32),
        "w1": std * jax.random.normal(ks[6], (DEPTH, DIM, HIDDEN), jnp.float32),
        "b1": jnp.zeros((DEPTH, 1, HIDDEN), jnp.float32),
        "w2": std * jax.random.normal(ks[7], (DEPTH, HIDDEN, DIM), jnp.float32),
        "b2": jnp.zeros((DEPTH, 1, DIM), jnp.float32),
        "norm_w": jnp.ones((1, DIM), jnp.float32),
        "norm_b": jnp.zeros((1, DIM), jnp.float32),
        "head_w": std * jax.random.normal(ks[8], (DIM, NUM_CLASSES), jnp.float32),
        "head_b": jnp.zeros((1, NUM_CLASSES), jnp.float32),
    }


def _pack_row(v):
    v = jnp.asarray(v, jnp.float32).reshape(1, -1)
    return jnp.pad(v, ((0, 0), (0, 128 - v.shape[1])))


def prepare_params(p):
    """One-time, parameter-only preprocessing (hoisted out of the per-call path)."""
    bf16 = jnp.bfloat16
    scale = HEAD_DIM ** -0.5
    # fused per-layer qkv slab with the attention scale folded into the q columns
    wqkv = jnp.concatenate([p["wq"] * scale, p["wk"], p["wv"]], axis=-1).astype(bf16)
    # additive "base": pos_embed everywhere, + cls_token on cls rows, + conv bias on patch rows
    pos = p["pos_embed"][0]
    base_one = pos.at[0, :].add(p["cls_token"][0, 0]).at[1:, :].add(p["b_patch"][0])
    base = jnp.zeros((M_PAD, DIM), jnp.float32).at[:M, :].set(jnp.tile(base_one, (BATCH, 1)))
    # pack all small per-layer vectors into one (DEPTH*7+3, 128) f32 slab
    rows = []
    for l in range(DEPTH):
        rows += [p["ln1_w"][l], p["ln1_b"][l], p["ln2_w"][l], p["ln2_b"][l],
                 p["bproj"][l], p["b2"][l], p["b1"][l]]
    rows += [p["norm_w"], p["norm_b"], p["head_b"]]
    vecs = jnp.concatenate([_pack_row(r) for r in rows], axis=0)
    return {
        "patch_w": p["w_patch"].astype(bf16),
        "base": base,
        "wqkv": wqkv,
        "wproj": p["wproj"].astype(bf16),
        "w1": p["w1"].astype(bf16),
        "w2": p["w2"].astype(bf16),
        "head_w": p["head_w"],            # tiny final matmul kept in f32
        "vecs": vecs,
    }


@jax.jit
def vit_forward_pallas(x_nchw, kp):
    # only input-dependent glue stays in the per-call path: patch extraction + zero padding
    patches = extract_patches(x_nchw).reshape(BATCH, NUM_PATCHES, CPP)
    patches = jnp.pad(patches, ((0, 0), (1, 0), (0, 0)))          # zero cls-slot row per image
    patches = patches.reshape(M, CPP)
    patches = jnp.pad(patches, ((0, M_PAD - M), (0, 0)))          # zero pad rows
    patches = patches.astype(jnp.bfloat16)
    return pl.pallas_call(
        vit_fused_kernel,
        out_shape=jax.ShapeDtypeStruct((BATCH, NUM_CLASSES), jnp.float32),
        in_specs=[_VMEM] * 9,
        out_specs=_VMEM,
    )(patches, kp["base"], kp["patch_w"], kp["wqkv"], kp["wproj"],
      kp["w1"], kp["w2"], kp["head_w"], kp["vecs"])


# ----------------------------------- pure-JAX reference -----------------------------------
def vit_forward_reference(x_nchw, p):
    hi = lax.Precision.HIGHEST
    b = x_nchw.shape[0]
    patches = extract_patches(x_nchw)
    xp = (jnp.dot(patches, p["w_patch"], precision=hi) + p["b_patch"]
          ).reshape(b, NUM_PATCHES, DIM)
    cls = jnp.broadcast_to(p["cls_token"], (b, 1, DIM))
    x = jnp.concatenate([cls, xp], axis=1) + p["pos_embed"]

    def ln(v, w, b_):
        mu = v.mean(-1, keepdims=True)
        var = ((v - mu) ** 2).mean(-1, keepdims=True)
        return (v - mu) / jnp.sqrt(var + EPS) * w + b_

    scale = HEAD_DIM ** -0.5
    split_heads = lambda t: t.reshape(b, SEQ, HEADS, HEAD_DIM).transpose(0, 2, 1, 3)
    for l in range(DEPTH):
        xn = ln(x, p["ln1_w"][l, 0], p["ln1_b"][l, 0])
        q = split_heads(jnp.einsum("bnd,de->bne", xn, p["wq"][l], precision=hi))
        k = split_heads(jnp.einsum("bnd,de->bne", xn, p["wk"][l], precision=hi))
        v = split_heads(jnp.einsum("bnd,de->bne", xn, p["wv"][l], precision=hi))
        s = jnp.einsum("bhqd,bhkd->bhqk", q, k, precision=hi) * scale
        a = jax.nn.softmax(s, axis=-1)
        o = jnp.einsum("bhqk,bhkd->bhqd", a, v, precision=hi)
        o = o.transpose(0, 2, 1, 3).reshape(b, SEQ, DIM)
        x = x + jnp.einsum("bnd,de->bne", o, p["wproj"][l], precision=hi) + p["bproj"][l, 0]
        xn2 = ln(x, p["ln2_w"][l, 0], p["ln2_b"][l, 0])
        h1 = jax.nn.gelu(
            jnp.einsum("bnd,dh->bnh", xn2, p["w1"][l], precision=hi) + p["b1"][l, 0],
            approximate=True)
        x = x + jnp.einsum("bnh,hd->bnd", h1, p["w2"][l], precision=hi) + p["b2"][l, 0]
    x = ln(x, p["norm_w"][0], p["norm_b"][0])
    return jnp.dot(x[:, 0], p["head_w"], precision=hi) + p["head_b"]


# ----------------------------------------- main -----------------------------------------
if __name__ == "__main__":
    key = jax.random.PRNGKey(0)
    k_in, k_par = jax.random.split(key)
    x = jax.random.normal(k_in, (BATCH, CHANNELS, IMG, IMG), jnp.float32)  # NCHW like PyTorch
    params = init_params(k_par)
    kernel_params = prepare_params(params)      # one-time, hoisted out of the per-call path

    logits = jax.block_until_ready(vit_forward_pallas(x, kernel_params))
    assert logits.shape == (BATCH, NUM_CLASSES)

    ref = jax.block_until_ready(vit_forward_reference(x, params))
    max_err = float(jnp.max(jnp.abs(logits - ref)))
    # bf16 MXU operands (vs the HIGHEST-precision f32 XLA reference) dominate the error
    # budget; the EUP approx reciprocal in the softmax is second order.  1e-2 absolute on
    # logits of O(0.1) magnitude leaves ~3x headroom over the expected few-e-3 error.
    assert max_err < 1e-2, f"mismatch vs reference: max abs err {max_err}"

    print("KERNEL_OK")
</pallas_src>

<mosaic_0001>
module attributes {stable_mosaic.version = 11 : i64} {
  func.func @vit_fused_kernel(%arg0: memref<16x192xbf16, #tpu.memory_space<vmem>>, %arg1: memref<16x32xf32, #tpu.memory_space<vmem>>, %arg2: memref<192x32xbf16, #tpu.memory_space<vmem>>, %arg3: memref<2x32x96xbf16, #tpu.memory_space<vmem>>, %arg4: memref<2x32x32xbf16, #tpu.memory_space<vmem>>, %arg5: memref<2x32x128xbf16, #tpu.memory_space<vmem>>, %arg6: memref<2x128x32xbf16, #tpu.memory_space<vmem>>, %arg7: memref<32x10xf32, #tpu.memory_space<vmem>>, %arg8: memref<17x128xf32, #tpu.memory_space<vmem>>, %arg9: memref<2x10xf32, #tpu.memory_space<vmem>>) attributes {dimension_semantics = [], scalar_prefetch = 0 : i64, scratch_operands = 0 : i64, tpu.core_type = #tpu.core_type<tc>} {
    %0 = tpu.iota {dimensions = array<i32: 0>} : vector<16x16xi32>
    %1 = tpu.iota {dimensions = array<i32: 1>} : vector<16x16xi32>
    %c0_i32 = arith.constant 0 : i32
    %2 = vector.broadcast %c0_i32 : i32 to vector<16x16xi32>
    %c5_i32 = arith.constant 5 : i32
    %3 = vector.broadcast %c5_i32 : i32 to vector<16x16xi32>
    %4 = arith.cmpi sge, %0, %3 : vector<16x16xi32>
    %5 = arith.extui %4 : vector<16x16xi1> to vector<16x16xi32>
    %6 = arith.addi %2, %5 : vector<16x16xi32>
    %c10_i32 = arith.constant 10 : i32
    %7 = vector.broadcast %c10_i32 : i32 to vector<16x16xi32>
    %8 = arith.cmpi slt, %0, %7 : vector<16x16xi32>
    %c-1_i32 = arith.constant -1 : i32
    %9 = vector.broadcast %c-1_i32 : i32 to vector<16x16xi32>
    %10 = arith.select %8, %6, %9 : vector<16x16xi1>, vector<16x16xi32>
    %c0_i32_0 = arith.constant 0 : i32
    %11 = vector.broadcast %c0_i32_0 : i32 to vector<16x16xi32>
    %c5_i32_1 = arith.constant 5 : i32
    %12 = vector.broadcast %c5_i32_1 : i32 to vector<16x16xi32>
    %13 = arith.cmpi sge, %1, %12 : vector<16x16xi32>
    %14 = arith.extui %13 : vector<16x16xi1> to vector<16x16xi32>
    %15 = arith.addi %11, %14 : vector<16x16xi32>
    %c10_i32_2 = arith.constant 10 : i32
    %16 = vector.broadcast %c10_i32_2 : i32 to vector<16x16xi32>
    %17 = arith.cmpi slt, %1, %16 : vector<16x16xi32>
    %c-1_i32_3 = arith.constant -1 : i32
    %18 = vector.broadcast %c-1_i32_3 : i32 to vector<16x16xi32>
    %19 = arith.select %17, %15, %18 : vector<16x16xi1>, vector<16x16xi32>
    %20 = arith.cmpi eq, %10, %19 : vector<16x16xi32>
    %cst = arith.constant 0.000000e+00 : f32
    %cst_4 = arith.constant -1.000000e+09 : f32
    %21 = vector.broadcast %cst : f32 to vector<16x16xf32>
    %22 = vector.broadcast %cst_4 : f32 to vector<16x16xf32>
    %23 = arith.select %20, %21, %22 : vector<16x16xi1>, vector<16x16xf32>
    %c0 = arith.constant 0 : index
    %c0_5 = arith.constant 0 : index
    %24 = vector.load %arg0[%c0, %c0_5] : memref<16x192xbf16, #tpu.memory_space<vmem>>, vector<16x192xbf16>
    %c0_6 = arith.constant 0 : index
    %c0_7 = arith.constant 0 : index
    %25 = vector.load %arg2[%c0_6, %c0_7] : memref<192x32xbf16, #tpu.memory_space<vmem>>, vector<192x32xbf16>
    %cst_8 = arith.constant dense<0.000000e+00> : vector<16x32xf32>
    %26 = tpu.matmul %24, %25, %cst_8 {dimension_numbers = #tpu.dot_dimension_numbers<[1], [0], [0], [1], [0, 0, 1, 1], [], []>} : vector<16x192xbf16>, vector<192x32xbf16>, vector<16x32xf32> -> vector<16x32xf32>
    %c0_9 = arith.constant 0 : index
    %c0_10 = arith.constant 0 : index
    %27 = vector.load %arg1[%c0_9, %c0_10] : memref<16x32xf32, #tpu.memory_space<vmem>>, vector<16x32xf32>
    %28 = arith.addf %26, %27 : vector<16x32xf32>
    %c0_11 = arith.constant 0 : index
    %c0_12 = arith.constant 0 : index
    %29 = vector.load %arg8[%c0_11, %c0_12] : memref<17x128xf32, #tpu.memory_space<vmem>>, vector<1x32xf32>
    %c1 = arith.constant 1 : index
    %c0_13 = arith.constant 0 : index
    %30 = vector.load %arg8[%c1, %c0_13] : memref<17x128xf32, #tpu.memory_space<vmem>>, vector<1x32xf32>
    %c2 = arith.constant 2 : index
    %c0_14 = arith.constant 0 : index
    %31 = vector.load %arg8[%c2, %c0_14] : memref<17x128xf32, #tpu.memory_space<vmem>>, vector<1x32xf32>
    %c3 = arith.constant 3 : index
    %c0_15 = arith.constant 0 : index
    %32 = vector.load %arg8[%c3, %c0_15] : memref<17x128xf32, #tpu.memory_space<vmem>>, vector<1x32xf32>
    %c4 = arith.constant 4 : index
    %c0_16 = arith.constant 0 : index
    %33 = vector.load %arg8[%c4, %c0_16] : memref<17x128xf32, #tpu.memory_space<vmem>>, vector<1x32xf32>
    %c5 = arith.constant 5 : index
    %c0_17 = arith.constant 0 : index
    %34 = vector.load %arg8[%c5, %c0_17] : memref<17x128xf32, #tpu.memory_space<vmem>>, vector<1x32xf32>
    %c6 = arith.constant 6 : index
    %c0_18 = arith.constant 0 : index
    %35 = vector.load %arg8[%c6, %c0_18] : memref<17x128xf32, #tpu.memory_space<vmem>>, vector<1x128xf32>
    %cst_19 = arith.constant dense<0.000000e+00> : vector<16xf32>
    %36 = vector.multi_reduction <add>, %28, %cst_19 [1] : vector<16x32xf32> to vector<16xf32>
    %37 = vector.shape_cast %36 : vector<16xf32> to vector<16x1xf32>
    %cst_20 = arith.constant 3.200000e+01 : f32
    %38 = vector.broadcast %cst_20 : f32 to vector<16x1xf32>
    %39 = arith.divf %37, %38 : vector<16x1xf32>
    %40 = vector.broadcast %39 : vector<16x1xf32> to vector<16x32xf32>
    %41 = arith.subf %28, %40 : vector<16x32xf32>
    %42 = arith.mulf %41, %41 : vector<16x32xf32>
    %cst_21 = arith.constant dense<0.000000e+00> : vector<16xf32>
    %43 = vector.multi_reduction <add>, %42, %cst_21 [1] : vector<16x32xf32> to vector<16xf32>
    %44 = vector.shape_cast %43 : vector<16xf32> to vector<16x1xf32>
    %cst_22 = arith.constant 3.200000e+01 : f32
    %45 = vector.broadcast %cst_22 : f32 to vector<16x1xf32>
    %46 = arith.divf %44, %45 : vector<16x1xf32>
    %cst_23 = arith.constant 9.99999974E-6 : f32
    %47 = vector.broadcast %cst_23 : f32 to vector<16x1xf32>
    %48 = arith.addf %46, %47 : vector<16x1xf32>
    %49 = math.rsqrt %48 : vector<16x1xf32>
    %50 = vector.broadcast %49 : vector<16x1xf32> to vector<16x32xf32>
    %51 = arith.mulf %41, %50 : vector<16x32xf32>
    %52 = vector.broadcast %29 : vector<1x32xf32> to vector<16x32xf32>
    %53 = arith.mulf %51, %52 : vector<16x32xf32>
    %54 = vector.broadcast %30 : vector<1x32xf32> to vector<16x32xf32>
    %55 = arith.addf %53, %54 : vector<16x32xf32>
    %56 = arith.truncf %55 : vector<16x32xf32> to vector<16x32xbf16>
    %c0_24 = arith.constant 0 : index
    %c0_25 = arith.constant 0 : index
    %c0_26 = arith.constant 0 : index
    %57 = vector.load %arg3[%c0_24, %c0_25, %c0_26] : memref<2x32x96xbf16, #tpu.memory_space<vmem>>, vector<1x32x96xbf16>
    %58 = vector.shape_cast %57 : vector<1x32x96xbf16> to vector<32x96xbf16>
    %cst_27 = arith.constant dense<0.000000e+00> : vector<16x96xf32>
    %59 = tpu.matmul %56, %58, %cst_27 {dimension_numbers = #tpu.dot_dimension_numbers<[1], [0], [0], [1], [0, 0, 1, 1], [], []>} : vector<16x32xbf16>, vector<32x96xbf16>, vector<16x96xf32> -> vector<16x96xf32>
    %60 = arith.truncf %59 : vector<16x96xf32> to vector<16x96xbf16>
    %61 = vector.extract_strided_slice %60 {offsets = [0, 0], sizes = [16, 8], strides = [1, 1]} : vector<16x96xbf16> to vector<16x8xbf16>
    %62 = vector.extract_strided_slice %60 {offsets = [0, 32], sizes = [16, 8], strides = [1, 1]} : vector<16x96xbf16> to vector<16x8xbf16>
    %63 = vector.extract_strided_slice %60 {offsets = [0, 64], sizes = [16, 8], strides = [1, 1]} : vector<16x96xbf16> to vector<16x8xbf16>
    %cst_28 = arith.constant dense<0.000000e+00> : vector<16x16xf32>
    %64 = tpu.matmul %61, %62, %cst_28 {dimension_numbers = #tpu.dot_dimension_numbers<[1], [1], [0], [0], [0, 0, 1, 0], [], []>} : vector<16x8xbf16>, vector<16x8xbf16>, vector<16x16xf32> -> vector<16x16xf32>
    %65 = arith.addf %64, %23 : vector<16x16xf32>
    %cst_29 = arith.constant dense<0xFF800000> : vector<16xf32>
    %66 = vector.multi_reduction <maximumf>, %65, %cst_29 [1] : vector<16x16xf32> to vector<16xf32>
    %67 = vector.shape_cast %66 : vector<16xf32> to vector<16x1xf32>
    %68 = vector.broadcast %67 : vector<16x1xf32> to vector<16x16xf32>
    %69 = arith.subf %65, %68 : vector<16x16xf32>
    %70 = math.exp %69 : vector<16x16xf32>
    %cst_30 = arith.constant dense<0.000000e+00> : vector<16xf32>
    %71 = vector.multi_reduction <add>, %70, %cst_30 [1] : vector<16x16xf32> to vector<16xf32>
    %72 = vector.shape_cast %71 : vector<16xf32> to vector<16x1xf32>
    %73 = tpu.reciprocal %72 {approx = true} : vector<16x1xf32> -> vector<16x1xf32>
    %74 = vector.broadcast %73 : vector<16x1xf32> to vector<16x16xf32>
    %75 = arith.mulf %70, %74 : vector<16x16xf32>
    %76 = arith.truncf %75 : vector<16x16xf32> to vector<16x16xbf16>
    %cst_31 = arith.constant dense<0.000000e+00> : vector<16x8xf32>
    %77 = tpu.matmul %76, %63, %cst_31 {dimension_numbers = #tpu.dot_dimension_numbers<[1], [0], [0], [1], [0, 0, 1, 1], [], []>} : vector<16x16xbf16>, vector<16x8xbf16>, vector<16x8xf32> -> vector<16x8xf32>
    %78 = vector.extract_strided_slice %60 {offsets = [0, 8], sizes = [16, 8], strides = [1, 1]} : vector<16x96xbf16> to vector<16x8xbf16>
    %79 = vector.extract_strided_slice %60 {offsets = [0, 40], sizes = [16, 8], strides = [1, 1]} : vector<16x96xbf16> to vector<16x8xbf16>
    %80 = vector.extract_strided_slice %60 {offsets = [0, 72], sizes = [16, 8], strides = [1, 1]} : vector<16x96xbf16> to vector<16x8xbf16>
    %cst_32 = arith.constant dense<0.000000e+00> : vector<16x16xf32>
    %81 = tpu.matmul %78, %79, %cst_32 {dimension_numbers = #tpu.dot_dimension_numbers<[1], [1], [0], [0], [0, 0, 1, 0], [], []>} : vector<16x8xbf16>, vector<16x8xbf16>, vector<16x16xf32> -> vector<16x16xf32>
    %82 = arith.addf %81, %23 : vector<16x16xf32>
    %cst_33 = arith.constant dense<0xFF800000> : vector<16xf32>
    %83 = vector.multi_reduction <maximumf>, %82, %cst_33 [1] : vector<16x16xf32> to vector<16xf32>
    %84 = vector.shape_cast %83 : vector<16xf32> to vector<16x1xf32>
    %85 = vector.broadcast %84 : vector<16x1xf32> to vector<16x16xf32>
    %86 = arith.subf %82, %85 : vector<16x16xf32>
    %87 = math.exp %86 : vector<16x16xf32>
    %cst_34 = arith.constant dense<0.000000e+00> : vector<16xf32>
    %88 = vector.multi_reduction <add>, %87, %cst_34 [1] : vector<16x16xf32> to vector<16xf32>
    %89 = vector.shape_cast %88 : vector<16xf32> to vector<16x1xf32>
    %90 = tpu.reciprocal %89 {approx = true} : vector<16x1xf32> -> vector<16x1xf32>
    %91 = vector.broadcast %90 : vector<16x1xf32> to vector<16x16xf32>
    %92 = arith.mulf %87, %91 : vector<16x16xf32>
    %93 = arith.truncf %92 : vector<16x16xf32> to vector<16x16xbf16>
    %cst_35 = arith.constant dense<0.000000e+00> : vector<16x8xf32>
    %94 = tpu.matmul %93, %80, %cst_35 {dimension_numbers = #tpu.dot_dimension_numbers<[1], [0], [0], [1], [0, 0, 1, 1], [], []>} : vector<16x16xbf16>, vector<16x8xbf16>, vector<16x8xf32> -> vector<16x8xf32>
    %95 = vector.extract_strided_slice %60 {offsets = [0, 16], sizes = [16, 8], strides = [1, 1]} : vector<16x96xbf16> to vector<16x8xbf16>
    %96 = vector.extract_strided_slice %60 {offsets = [0, 48], sizes = [16, 8], strides = [1, 1]} : vector<16x96xbf16> to vector<16x8xbf16>
    %97 = vector.extract_strided_slice %60 {offsets = [0, 80], sizes = [16, 8], strides = [1, 1]} : vector<16x96xbf16> to vector<16x8xbf16>
    %cst_36 = arith.constant dense<0.000000e+00> : vector<16x16xf32>
    %98 = tpu.matmul %95, %96, %cst_36 {dimension_numbers = #tpu.dot_dimension_numbers<[1], [1], [0], [0], [0, 0, 1, 0], [], []>} : vector<16x8xbf16>, vector<16x8xbf16>, vector<16x16xf32> -> vector<16x16xf32>
    %99 = arith.addf %98, %23 : vector<16x16xf32>
    %cst_37 = arith.constant dense<0xFF800000> : vector<16xf32>
    %100 = vector.multi_reduction <maximumf>, %99, %cst_37 [1] : vector<16x16xf32> to vector<16xf32>
    %101 = vector.shape_cast %100 : vector<16xf32> to vector<16x1xf32>
    %102 = vector.broadcast %101 : vector<16x1xf32> to vector<16x16xf32>
    %103 = arith.subf %99, %102 : vector<16x16xf32>
    %104 = math.exp %103 : vector<16x16xf32>
    %cst_38 = arith.constant dense<0.000000e+00> : vector<16xf32>
    %105 = vector.multi_reduction <add>, %104, %cst_38 [1] : vector<16x16xf32> to vector<16xf32>
    %106 = vector.shape_cast %105 : vector<16xf32> to vector<16x1xf32>
    %107 = tpu.reciprocal %106 {approx = true} : vector<16x1xf32> -> vector<16x1xf32>
    %108 = vector.broadcast %107 : vector<16x1xf32> to vector<16x16xf32>
    %109 = arith.mulf %104, %108 : vector<16x16xf32>
    %110 = arith.truncf %109 : vector<16x16xf32> to vector<16x16xbf16>
    %cst_39 = arith.constant dense<0.000000e+00> : vector<16x8xf32>
    %111 = tpu.matmul %110, %97, %cst_39 {dimension_numbers = #tpu.dot_dimension_numbers<[1], [0], [0], [1], [0, 0, 1, 1], [], []>} : vector<16x16xbf16>, vector<16x8xbf16>, vector<16x8xf32> -> vector<16x8xf32>
    %112 = vector.extract_strided_slice %60 {offsets = [0, 24], sizes = [16, 8], strides = [1, 1]} : vector<16x96xbf16> to vector<16x8xbf16>
    %113 = vector.extract_strided_slice %60 {offsets = [0, 56], sizes = [16, 8], strides = [1, 1]} : vector<16x96xbf16> to vector<16x8xbf16>
    %114 = vector.extract_strided_slice %60 {offsets = [0, 88], sizes = [16, 8], strides = [1, 1]} : vector<16x96xbf16> to vector<16x8xbf16>
    %cst_40 = arith.constant dense<0.000000e+00> : vector<16x16xf32>
    %115 = tpu.matmul %112, %113, %cst_40 {dimension_numbers = #tpu.dot_dimension_numbers<[1], [1], [0], [0], [0, 0, 1, 0], [], []>} : vector<16x8xbf16>, vector<16x8xbf16>, vector<16x16xf32> -> vector<16x16xf32>
    %116 = arith.addf %115, %23 : vector<16x16xf32>
    %cst_41 = arith.constant dense<0xFF800000> : vector<16xf32>
    %117 = vector.multi_reduction <maximumf>, %116, %cst_41 [1] : vector<16x16xf32> to vector<16xf32>
    %118 = vector.shape_cast %117 : vector<16xf32> to vector<16x1xf32>
    %119 = vector.broadcast %118 : vector<16x1xf32> to vector<16x16xf32>
    %120 = arith.subf %116, %119 : vector<16x16xf32>
    %121 = math.exp %120 : vector<16x16xf32>
    %cst_42 = arith.constant dense<0.000000e+00> : vector<16xf32>
    %122 = vector.multi_reduction <add>, %121, %cst_42 [1] : vector<16x16xf32> to vector<16xf32>
    %123 = vector.shape_cast %122 : vector<16xf32> to vector<16x1xf32>
    %124 = tpu.reciprocal %123 {approx = true} : vector<16x1xf32> -> vector<16x1xf32>
    %125 = vector.broadcast %124 : vector<16x1xf32> to vector<16x16xf32>
    %126 = arith.mulf %121, %125 : vector<16x16xf32>
    %127 = arith.truncf %126 : vector<16x16xf32> to vector<16x16xbf16>
    %cst_43 = arith.constant dense<0.000000e+00> : vector<16x8xf32>
    %128 = tpu.matmul %127, %114, %cst_43 {dimension_numbers = #tpu.dot_dimension_numbers<[1], [0], [0], [1], [0, 0, 1, 1], [], []>} : vector<16x16xbf16>, vector<16x8xbf16>, vector<16x8xf32> -> vector<16x8xf32>
    %129 = tpu.concatenate %77, %94, %111, %128 in 1 : vector<16x8xf32>, vector<16x8xf32>, vector<16x8xf32>, vector<16x8xf32> -> vector<16x32xf32>
    %130 = arith.truncf %129 : vector<16x32xf32> to vector<16x32xbf16>
    %c0_44 = arith.constant 0 : index
    %c0_45 = arith.constant 0 : index
    %c0_46 = arith.constant 0 : index
    %131 = vector.load %arg4[%c0_44, %c0_45, %c0_46] : memref<2x32x32xbf16, #tpu.memory_space<vmem>>, vector<1x32x32xbf16>
    %132 = vector.shape_cast %131 : vector<1x32x32xbf16> to vector<32x32xbf16>
    %cst_47 = arith.constant dense<0.000000e+00> : vector<16x32xf32>
    %133 = tpu.matmul %130, %132, %cst_47 {dimension_numbers = #tpu.dot_dimension_numbers<[1], [0], [0], [1], [0, 0, 1, 1], [], []>} : vector<16x32xbf16>, vector<32x32xbf16>, vector<16x32xf32> -> vector<16x32xf32>
    %134 = arith.addf %28, %133 : vector<16x32xf32>
    %135 = vector.broadcast %33 : vector<1x32xf32> to vector<16x32xf32>
    %136 = arith.addf %134, %135 : vector<16x32xf32>
    %cst_48 = arith.constant dense<0.000000e+00> : vector<16xf32>
    %137 = vector.multi_reduction <add>, %136, %cst_48 [1] : vector<16x32xf32> to vector<16xf32>
    %138 = vector.shape_cast %137 : vector<16xf32> to vector<16x1xf32>
    %cst_49 = arith.constant 3.200000e+01 : f32
    %139 = vector.broadcast %cst_49 : f32 to vector<16x1xf32>
    %140 = arith.divf %138, %139 : vector<16x1xf32>
    %141 = vector.broadcast %140 : vector<16x1xf32> to vector<16x32xf32>
    %142 = arith.subf %136, %141 : vector<16x32xf32>
    %143 = arith.mulf %142, %142 : vector<16x32xf32>
    %cst_50 = arith.constant dense<0.000000e+00> : vector<16xf32>
    %144 = vector.multi_reduction <add>, %143, %cst_50 [1] : vector<16x32xf32> to vector<16xf32>
    %145 = vector.shape_cast %144 : vector<16xf32> to vector<16x1xf32>
    %cst_51 = arith.constant 3.200000e+01 : f32
    %146 = vector.broadcast %cst_51 : f32 to vector<16x1xf32>
    %147 = arith.divf %145, %146 : vector<16x1xf32>
    %cst_52 = arith.constant 9.99999974E-6 : f32
    %148 = vector.broadcast %cst_52 : f32 to vector<16x1xf32>
    %149 = arith.addf %147, %148 : vector<16x1xf32>
    %150 = math.rsqrt %149 : vector<16x1xf32>
    %151 = vector.broadcast %150 : vector<16x1xf32> to vector<16x32xf32>
    %152 = arith.mulf %142, %151 : vector<16x32xf32>
    %153 = vector.broadcast %31 : vector<1x32xf32> to vector<16x32xf32>
    %154 = arith.mulf %152, %153 : vector<16x32xf32>
    %155 = vector.broadcast %32 : vector<1x32xf32> to vector<16x32xf32>
    %156 = arith.addf %154, %155 : vector<16x32xf32>
    %157 = arith.truncf %156 : vector<16x32xf32> to vector<16x32xbf16>
    %c0_53 = arith.constant 0 : index
    %c0_54 = arith.constant 0 : index
    %c0_55 = arith.constant 0 : index
    %158 = vector.load %arg5[%c0_53, %c0_54, %c0_55] : memref<2x32x128xbf16, #tpu.memory_space<vmem>>, vector<1x32x128xbf16>
    %159 = vector.shape_cast %158 : vector<1x32x128xbf16> to vector<32x128xbf16>
    %cst_56 = arith.constant dense<0.000000e+00> : vector<16x128xf32>
    %160 = tpu.matmul %157, %159, %cst_56 {dimension_numbers = #tpu.dot_dimension_numbers<[1], [0], [0], [1], [0, 0, 1, 1], [], []>} : vector<16x32xbf16>, vector<32x128xbf16>, vector<16x128xf32> -> vector<16x128xf32>
    %161 = vector.broadcast %35 : vector<1x128xf32> to vector<16x128xf32>
    %162 = arith.addf %160, %161 : vector<16x128xf32>
    %163 = arith.mulf %162, %162 : vector<16x128xf32>
    %164 = arith.mulf %162, %163 : vector<16x128xf32>
    %cst_57 = arith.constant 4.471500e-02 : f32
    %165 = vector.broadcast %cst_57 : f32 to vector<16x128xf32>
    %166 = arith.mulf %165, %164 : vector<16x128xf32>
    %167 = arith.addf %162, %166 : vector<16x128xf32>
    %cst_58 = arith.constant 0.797884583 : f32
    %168 = vector.broadcast %cst_58 : f32 to vector<16x128xf32>
    %169 = arith.mulf %168, %167 : vector<16x128xf32>
    %170 = math.tanh %169 : vector<16x128xf32>
    %cst_59 = arith.constant 1.000000e+00 : f32
    %171 = vector.broadcast %cst_59 : f32 to vector<16x128xf32>
    %172 = arith.addf %171, %170 : vector<16x128xf32>
    %cst_60 = arith.constant 5.000000e-01 : f32
    %173 = vector.broadcast %cst_60 : f32 to vector<16x128xf32>
    %174 = arith.mulf %173, %172 : vector<16x128xf32>
    %175 = arith.mulf %162, %174 : vector<16x128xf32>
    %176 = arith.truncf %175 : vector<16x128xf32> to vector<16x128xbf16>
    %c0_61 = arith.constant 0 : index
    %c0_62 = arith.constant 0 : index
    %c0_63 = arith.constant 0 : index
    %177 = vector.load %arg6[%c0_61, %c0_62, %c0_63] : memref<2x128x32xbf16, #tpu.memory_space<vmem>>, vector<1x128x32xbf16>
    %178 = vector.shape_cast %177 : vector<1x128x32xbf16> to vector<128x32xbf16>
    %cst_64 = arith.constant dense<0.000000e+00> : vector<16x32xf32>
    %179 = tpu.matmul %176, %178, %cst_64 {dimension_numbers = #tpu.dot_dimension_numbers<[1], [0], [0], [1], [0, 0, 1, 1], [], []>} : vector<16x128xbf16>, vector<128x32xbf16>, vector<16x32xf32> -> vector<16x32xf32>
    %180 = arith.addf %136, %179 : vector<16x32xf32>
    %181 = vector.broadcast %34 : vector<1x32xf32> to vector<16x32xf32>
    %182 = arith.addf %180, %181 : vector<16x32xf32>
    %c7 = arith.constant 7 : index
    %c0_65 = arith.constant 0 : index
    %183 = vector.load %arg8[%c7, %c0_65] : memref<17x128xf32, #tpu.memory_space<vmem>>, vector<1x32xf32>
    %c8 = arith.constant 8 : index
    %c0_66 = arith.constant 0 : index
    %184 = vector.load %arg8[%c8, %c0_66] : memref<17x128xf32, #tpu.memory_space<vmem>>, vector<1x32xf32>
    %c9 = arith.constant 9 : index
    %c0_67 = arith.constant 0 : index
    %185 = vector.load %arg8[%c9, %c0_67] : memref<17x128xf32, #tpu.memory_space<vmem>>, vector<1x32xf32>
    %c10 = arith.constant 10 : index
    %c0_68 = arith.constant 0 : index
    %186 = vector.load %arg8[%c10, %c0_68] : memref<17x128xf32, #tpu.memory_space<vmem>>, vector<1x32xf32>
    %c11 = arith.constant 11 : index
    %c0_69 = arith.constant 0 : index
    %187 = vector.load %arg8[%c11, %c0_69] : memref<17x128xf32, #tpu.memory_space<vmem>>, vector<1x32xf32>
    %c12 = arith.constant 12 : index
    %c0_70 = arith.constant 0 : index
    %188 = vector.load %arg8[%c12, %c0_70] : memref<17x128xf32, #tpu.memory_space<vmem>>, vector<1x32xf32>
    %c13 = arith.constant 13 : index
    %c0_71 = arith.constant 0 : index
    %189 = vector.load %arg8[%c13, %c0_71] : memref<17x128xf32, #tpu.memory_space<vmem>>, vector<1x128xf32>
    %cst_72 = arith.constant dense<0.000000e+00> : vector<16xf32>
    %190 = vector.multi_reduction <add>, %182, %cst_72 [1] : vector<16x32xf32> to vector<16xf32>
    %191 = vector.shape_cast %190 : vector<16xf32> to vector<16x1xf32>
    %cst_73 = arith.constant 3.200000e+01 : f32
    %192 = vector.broadcast %cst_73 : f32 to vector<16x1xf32>
    %193 = arith.divf %191, %192 : vector<16x1xf32>
    %194 = vector.broadcast %193 : vector<16x1xf32> to vector<16x32xf32>
    %195 = arith.subf %182, %194 : vector<16x32xf32>
    %196 = arith.mulf %195, %195 : vector<16x32xf32>
    %cst_74 = arith.constant dense<0.000000e+00> : vector<16xf32>
    %197 = vector.multi_reduction <add>, %196, %cst_74 [1] : vector<16x32xf32> to vector<16xf32>
    %198 = vector.shape_cast %197 : vector<16xf32> to vector<16x1xf32>
    %cst_75 = arith.constant 3.200000e+01 : f32
    %199 = vector.broadcast %cst_75 : f32 to vector<16x1xf32>
    %200 = arith.divf %198, %199 : vector<16x1xf32>
    %cst_76 = arith.constant 9.99999974E-6 : f32
    %201 = vector.broadcast %cst_76 : f32 to vector<16x1xf32>
    %202 = arith.addf %200, %201 : vector<16x1xf32>
    %203 = math.rsqrt %202 : vector<16x1xf32>
    %204 = vector.broadcast %203 : vector<16x1xf32> to vector<16x32xf32>
    %205 = arith.mulf %195, %204 : vector<16x32xf32>
    %206 = vector.broadcast %183 : vector<1x32xf32> to vector<16x32xf32>
    %207 = arith.mulf %205, %206 : vector<16x32xf32>
    %208 = vector.broadcast %184 : vector<1x32xf32> to vector<16x32xf32>
    %209 = arith.addf %207, %208 : vector<16x32xf32>
    %210 = arith.truncf %209 : vector<16x32xf32> to vector<16x32xbf16>
    %c1_77 = arith.constant 1 : index
    %c0_78 = arith.constant 0 : index
    %c0_79 = arith.constant 0 : index
    %211 = vector.load %arg3[%c1_77, %c0_78, %c0_79] : memref<2x32x96xbf16, #tpu.memory_space<vmem>>, vector<1x32x96xbf16>
    %212 = vector.shape_cast %211 : vector<1x32x96xbf16> to vector<32x96xbf16>
    %cst_80 = arith.constant dense<0.000000e+00> : vector<16x96xf32>
    %213 = tpu.matmul %210, %212, %cst_80 {dimension_numbers = #tpu.dot_dimension_numbers<[1], [0], [0], [1], [0, 0, 1, 1], [], []>} : vector<16x32xbf16>, vector<32x96xbf16>, vector<16x96xf32> -> vector<16x96xf32>
    %214 = arith.truncf %213 : vector<16x96xf32> to vector<16x96xbf16>
    %215 = vector.extract_strided_slice %214 {offsets = [0, 0], sizes = [16, 8], strides = [1, 1]} : vector<16x96xbf16> to vector<16x8xbf16>
    %216 = vector.extract_strided_slice %214 {offsets = [0, 32], sizes = [16, 8], strides = [1, 1]} : vector<16x96xbf16> to vector<16x8xbf16>
    %217 = vector.extract_strided_slice %214 {offsets = [0, 64], sizes = [16, 8], strides = [1, 1]} : vector<16x96xbf16> to vector<16x8xbf16>
    %cst_81 = arith.constant dense<0.000000e+00> : vector<16x16xf32>
    %218 = tpu.matmul %215, %216, %cst_81 {dimension_numbers = #tpu.dot_dimension_numbers<[1], [1], [0], [0], [0, 0, 1, 0], [], []>} : vector<16x8xbf16>, vector<16x8xbf16>, vector<16x16xf32> -> vector<16x16xf32>
    %219 = arith.addf %218, %23 : vector<16x16xf32>
    %cst_82 = arith.constant dense<0xFF800000> : vector<16xf32>
    %220 = vector.multi_reduction <maximumf>, %219, %cst_82 [1] : vector<16x16xf32> to vector<16xf32>
    %221 = vector.shape_cast %220 : vector<16xf32> to vector<16x1xf32>
    %222 = vector.broadcast %221 : vector<16x1xf32> to vector<16x16xf32>
    %223 = arith.subf %219, %222 : vector<16x16xf32>
    %224 = math.exp %223 : vector<16x16xf32>
    %cst_83 = arith.constant dense<0.000000e+00> : vector<16xf32>
    %225 = vector.multi_reduction <add>, %224, %cst_83 [1] : vector<16x16xf32> to vector<16xf32>
    %226 = vector.shape_cast %225 : vector<16xf32> to vector<16x1xf32>
    %227 = tpu.reciprocal %226 {approx = true} : vector<16x1xf32> -> vector<16x1xf32>
    %228 = vector.broadcast %227 : vector<16x1xf32> to vector<16x16xf32>
    %229 = arith.mulf %224, %228 : vector<16x16xf32>
    %230 = arith.truncf %229 : vector<16x16xf32> to vector<16x16xbf16>
    %cst_84 = arith.constant dense<0.000000e+00> : vector<16x8xf32>
    %231 = tpu.matmul %230, %217, %cst_84 {dimension_numbers = #tpu.dot_dimension_numbers<[1], [0], [0], [1], [0, 0, 1, 1], [], []>} : vector<16x16xbf16>, vector<16x8xbf16>, vector<16x8xf32> -> vector<16x8xf32>
    %232 = vector.extract_strided_slice %214 {offsets = [0, 8], sizes = [16, 8], strides = [1, 1]} : vector<16x96xbf16> to vector<16x8xbf16>
    %233 = vector.extract_strided_slice %214 {offsets = [0, 40], sizes = [16, 8], strides = [1, 1]} : vector<16x96xbf16> to vector<16x8xbf16>
    %234 = vector.extract_strided_slice %214 {offsets = [0, 72], sizes = [16, 8], strides = [1, 1]} : vector<16x96xbf16> to vector<16x8xbf16>
    %cst_85 = arith.constant dense<0.000000e+00> : vector<16x16xf32>
    %235 = tpu.matmul %232, %233, %cst_85 {dimension_numbers = #tpu.dot_dimension_numbers<[1], [1], [0], [0], [0, 0, 1, 0], [], []>} : vector<16x8xbf16>, vector<16x8xbf16>, vector<16x16xf32> -> vector<16x16xf32>
    %236 = arith.addf %235, %23 : vector<16x16xf32>
    %cst_86 = arith.constant dense<0xFF800000> : vector<16xf32>
    %237 = vector.multi_reduction <maximumf>, %236, %cst_86 [1] : vector<16x16xf32> to vector<16xf32>
    %238 = vector.shape_cast %237 : vector<16xf32> to vector<16x1xf32>
    %239 = vector.broadcast %238 : vector<16x1xf32> to vector<16x16xf32>
    %240 = arith.subf %236, %239 : vector<16x16xf32>
    %241 = math.exp %240 : vector<16x16xf32>
    %cst_87 = arith.constant dense<0.000000e+00> : vector<16xf32>
    %242 = vector.multi_reduction <add>, %241, %cst_87 [1] : vector<16x16xf32> to vector<16xf32>
    %243 = vector.shape_cast %242 : vector<16xf32> to vector<16x1xf32>
    %244 = tpu.reciprocal %243 {approx = true} : vector<16x1xf32> -> vector<16x1xf32>
    %245 = vector.broadcast %244 : vector<16x1xf32> to vector<16x16xf32>
    %246 = arith.mulf %241, %245 : vector<16x16xf32>
    %247 = arith.truncf %246 : vector<16x16xf32> to vector<16x16xbf16>
    %cst_88 = arith.constant dense<0.000000e+00> : vector<16x8xf32>
    %248 = tpu.matmul %247, %234, %cst_88 {dimension_numbers = #tpu.dot_dimension_numbers<[1], [0], [0], [1], [0, 0, 1, 1], [], []>} : vector<16x16xbf16>, vector<16x8xbf16>, vector<16x8xf32> -> vector<16x8xf32>
    %249 = vector.extract_strided_slice %214 {offsets = [0, 16], sizes = [16, 8], strides = [1, 1]} : vector<16x96xbf16> to vector<16x8xbf16>
    %250 = vector.extract_strided_slice %214 {offsets = [0, 48], sizes = [16, 8], strides = [1, 1]} : vector<16x96xbf16> to vector<16x8xbf16>
    %251 = vector.extract_strided_slice %214 {offsets = [0, 80], sizes = [16, 8], strides = [1, 1]} : vector<16x96xbf16> to vector<16x8xbf16>
    %cst_89 = arith.constant dense<0.000000e+00> : vector<16x16xf32>
    %252 = tpu.matmul %249, %250, %cst_89 {dimension_numbers = #tpu.dot_dimension_numbers<[1], [1], [0], [0], [0, 0, 1, 0], [], []>} : vector<16x8xbf16>, vector<16x8xbf16>, vector<16x16xf32> -> vector<16x16xf32>
    %253 = arith.addf %252, %23 : vector<16x16xf32>
    %cst_90 = arith.constant dense<0xFF800000> : vector<16xf32>
    %254 = vector.multi_reduction <maximumf>, %253, %cst_90 [1] : vector<16x16xf32> to vector<16xf32>
    %255 = vector.shape_cast %254 : vector<16xf32> to vector<16x1xf32>
    %256 = vector.broadcast %255 : vector<16x1xf32> to vector<16x16xf32>
    %257 = arith.subf %253, %256 : vector<16x16xf32>
    %258 = math.exp %257 : vector<16x16xf32>
    %cst_91 = arith.constant dense<0.000000e+00> : vector<16xf32>
    %259 = vector.multi_reduction <add>, %258, %cst_91 [1] : vector<16x16xf32> to vector<16xf32>
    %260 = vector.shape_cast %259 : vector<16xf32> to vector<16x1xf32>
    %261 = tpu.reciprocal %260 {approx = true} : vector<16x1xf32> -> vector<16x1xf32>
    %262 = vector.broadcast %261 : vector<16x1xf32> to vector<16x16xf32>
    %263 = arith.mulf %258, %262 : vector<16x16xf32>
    %264 = arith.truncf %263 : vector<16x16xf32> to vector<16x16xbf16>
    %cst_92 = arith.constant dense<0.000000e+00> : vector<16x8xf32>
    %265 = tpu.matmul %264, %251, %cst_92 {dimension_numbers = #tpu.dot_dimension_numbers<[1], [0], [0], [1], [0, 0, 1, 1], [], []>} : vector<16x16xbf16>, vector<16x8xbf16>, vector<16x8xf32> -> vector<16x8xf32>
    %266 = vector.extract_strided_slice %214 {offsets = [0, 24], sizes = [16, 8], strides = [1, 1]} : vector<16x96xbf16> to vector<16x8xbf16>
    %267 = vector.extract_strided_slice %214 {offsets = [0, 56], sizes = [16, 8], strides = [1, 1]} : vector<16x96xbf16> to vector<16x8xbf16>
    %268 = vector.extract_strided_slice %214 {offsets = [0, 88], sizes = [16, 8], strides = [1, 1]} : vector<16x96xbf16> to vector<16x8xbf16>
    %cst_93 = arith.constant dense<0.000000e+00> : vector<16x16xf32>
    %269 = tpu.matmul %266, %267, %cst_93 {dimension_numbers = #tpu.dot_dimension_numbers<[1], [1], [0], [0], [0, 0, 1, 0], [], []>} : vector<16x8xbf16>, vector<16x8xbf16>, vector<16x16xf32> -> vector<16x16xf32>
    %270 = arith.addf %269, %23 : vector<16x16xf32>
    %cst_94 = arith.constant dense<0xFF800000> : vector<16xf32>
    %271 = vector.multi_reduction <maximumf>, %270, %cst_94 [1] : vector<16x16xf32> to vector<16xf32>
    %272 = vector.shape_cast %271 : vector<16xf32> to vector<16x1xf32>
    %273 = vector.broadcast %272 : vector<16x1xf32> to vector<16x16xf32>
    %274 = arith.subf %270, %273 : vector<16x16xf32>
    %275 = math.exp %274 : vector<16x16xf32>
    %cst_95 = arith.constant dense<0.000000e+00> : vector<16xf32>
    %276 = vector.multi_reduction <add>, %275, %cst_95 [1] : vector<16x16xf32> to vector<16xf32>
    %277 = vector.shape_cast %276 : vector<16xf32> to vector<16x1xf32>
    %278 = tpu.reciprocal %277 {approx = true} : vector<16x1xf32> -> vector<16x1xf32>
    %279 = vector.broadcast %278 : vector<16x1xf32> to vector<16x16xf32>
    %280 = arith.mulf %275, %279 : vector<16x16xf32>
    %281 = arith.truncf %280 : vector<16x16xf32> to vector<16x16xbf16>
    %cst_96 = arith.constant dense<0.000000e+00> : vector<16x8xf32>
    %282 = tpu.matmul %281, %268, %cst_96 {dimension_numbers = #tpu.dot_dimension_numbers<[1], [0], [0], [1], [0, 0, 1, 1], [], []>} : vector<16x16xbf16>, vector<16x8xbf16>, vector<16x8xf32> -> vector<16x8xf32>
    %283 = tpu.concatenate %231, %248, %265, %282 in 1 : vector<16x8xf32>, vector<16x8xf32>, vector<16x8xf32>, vector<16x8xf32> -> vector<16x32xf32>
    %284 = arith.truncf %283 : vector<16x32xf32> to vector<16x32xbf16>
    %c1_97 = arith.constant 1 : index
    %c0_98 = arith.constant 0 : index
    %c0_99 = arith.constant 0 : index
    %285 = vector.load %arg4[%c1_97, %c0_98, %c0_99] : memref<2x32x32xbf16, #tpu.memory_space<vmem>>, vector<1x32x32xbf16>
    %286 = vector.shape_cast %285 : vector<1x32x32xbf16> to vector<32x32xbf16>
    %cst_100 = arith.constant dense<0.000000e+00> : vector<16x32xf32>
    %287 = tpu.matmul %284, %286, %cst_100 {dimension_numbers = #tpu.dot_dimension_numbers<[1], [0], [0], [1], [0, 0, 1, 1], [], []>} : vector<16x32xbf16>, vector<32x32xbf16>, vector<16x32xf32> -> vector<16x32xf32>
    %288 = arith.addf %182, %287 : vector<16x32xf32>
    %289 = vector.broadcast %187 : vector<1x32xf32> to vector<16x32xf32>
    %290 = arith.addf %288, %289 : vector<16x32xf32>
    %cst_101 = arith.constant dense<0.000000e+00> : vector<16xf32>
    %291 = vector.multi_reduction <add>, %290, %cst_101 [1] : vector<16x32xf32> to vector<16xf32>
    %292 = vector.shape_cast %291 : vector<16xf32> to vector<16x1xf32>
    %cst_102 = arith.constant 3.200000e+01 : f32
    %293 = vector.broadcast %cst_102 : f32 to vector<16x1xf32>
    %294 = arith.divf %292, %293 : vector<16x1xf32>
    %295 = vector.broadcast %294 : vector<16x1xf32> to vector<16x32xf32>
    %296 = arith.subf %290, %295 : vector<16x32xf32>
    %297 = arith.mulf %296, %296 : vector<16x32xf32>
    %cst_103 = arith.constant dense<0.000000e+00> : vector<16xf32>
    %298 = vector.multi_reduction <add>, %297, %cst_103 [1] : vector<16x32xf32> to vector<16xf32>
    %299 = vector.shape_cast %298 : vector<16xf32> to vector<16x1xf32>
    %cst_104 = arith.constant 3.200000e+01 : f32
    %300 = vector.broadcast %cst_104 : f32 to vector<16x1xf32>
    %301 = arith.divf %299, %300 : vector<16x1xf32>
    %cst_105 = arith.constant 9.99999974E-6 : f32
    %302 = vector.broadcast %cst_105 : f32 to vector<16x1xf32>
    %303 = arith.addf %301, %302 : vector<16x1xf32>
    %304 = math.rsqrt %303 : vector<16x1xf32>
    %305 = vector.broadcast %304 : vector<16x1xf32> to vector<16x32xf32>
    %306 = arith.mulf %296, %305 : vector<16x32xf32>
    %307 = vector.broadcast %185 : vector<1x32xf32> to vector<16x32xf32>
    %308 = arith.mulf %306, %307 : vector<16x32xf32>
    %309 = vector.broadcast %186 : vector<1x32xf32> to vector<16x32xf32>
    %310 = arith.addf %308, %309 : vector<16x32xf32>
    %311 = arith.truncf %310 : vector<16x32xf32> to vector<16x32xbf16>
    %c1_106 = arith.constant 1 : index
    %c0_107 = arith.constant 0 : index
    %c0_108 = arith.constant 0 : index
    %312 = vector.load %arg5[%c1_106, %c0_107, %c0_108] : memref<2x32x128xbf16, #tpu.memory_space<vmem>>, vector<1x32x128xbf16>
    %313 = vector.shape_cast %312 : vector<1x32x128xbf16> to vector<32x128xbf16>
    %cst_109 = arith.constant dense<0.000000e+00> : vector<16x128xf32>
    %314 = tpu.matmul %311, %313, %cst_109 {dimension_numbers = #tpu.dot_dimension_numbers<[1], [0], [0], [1], [0, 0, 1, 1], [], []>} : vector<16x32xbf16>, vector<32x128xbf16>, vector<16x128xf32> -> vector<16x128xf32>
    %315 = vector.broadcast %189 : vector<1x128xf32> to vector<16x128xf32>
    %316 = arith.addf %314, %315 : vector<16x128xf32>
    %317 = arith.mulf %316, %316 : vector<16x128xf32>
    %318 = arith.mulf %316, %317 : vector<16x128xf32>
    %cst_110 = arith.constant 4.471500e-02 : f32
    %319 = vector.broadcast %cst_110 : f32 to vector<16x128xf32>
    %320 = arith.mulf %319, %318 : vector<16x128xf32>
    %321 = arith.addf %316, %320 : vector<16x128xf32>
    %cst_111 = arith.constant 0.797884583 : f32
    %322 = vector.broadcast %cst_111 : f32 to vector<16x128xf32>
    %323 = arith.mulf %322, %321 : vector<16x128xf32>
    %324 = math.tanh %323 : vector<16x128xf32>
    %cst_112 = arith.constant 1.000000e+00 : f32
    %325 = vector.broadcast %cst_112 : f32 to vector<16x128xf32>
    %326 = arith.addf %325, %324 : vector<16x128xf32>
    %cst_113 = arith.constant 5.000000e-01 : f32
    %327 = vector.broadcast %cst_113 : f32 to vector<16x128xf32>
    %328 = arith.mulf %327, %326 : vector<16x128xf32>
    %329 = arith.mulf %316, %328 : vector<16x128xf32>
    %330 = arith.truncf %329 : vector<16x128xf32> to vector<16x128xbf16>
    %c1_114 = arith.constant 1 : index
    %c0_115 = arith.constant 0 : index
    %c0_116 = arith.constant 0 : index
    %331 = vector.load %arg6[%c1_114, %c0_115, %c0_116] : memref<2x128x32xbf16, #tpu.memory_space<vmem>>, vector<1x128x32xbf16>
    %332 = vector.shape_cast %331 : vector<1x128x32xbf16> to vector<128x32xbf16>
    %cst_117 = arith.constant dense<0.000000e+00> : vector<16x32xf32>
    %333 = tpu.matmul %330, %332, %cst_117 {dimension_numbers = #tpu.dot_dimension_numbers<[1], [0], [0], [1], [0, 0, 1, 1], [], []>} : vector<16x128xbf16>, vector<128x32xbf16>, vector<16x32xf32> -> vector<16x32xf32>
    %334 = arith.addf %290, %333 : vector<16x32xf32>
    %335 = vector.broadcast %188 : vector<1x32xf32> to vector<16x32xf32>
    %336 = arith.addf %334, %335 : vector<16x32xf32>
    %c14 = arith.constant 14 : index
    %c0_118 = arith.constant 0 : index
    %337 = vector.load %arg8[%c14, %c0_118] : memref<17x128xf32, #tpu.memory_space<vmem>>, vector<1x32xf32>
    %c15 = arith.constant 15 : index
    %c0_119 = arith.constant 0 : index
    %338 = vector.load %arg8[%c15, %c0_119] : memref<17x128xf32, #tpu.memory_space<vmem>>, vector<1x32xf32>
    %c16 = arith.constant 16 : index
    %c0_120 = arith.constant 0 : index
    %339 = vector.load %arg8[%c16, %c0_120] : memref<17x128xf32, #tpu.memory_space<vmem>>, vector<1x10xf32>
    %cst_121 = arith.constant dense<0.000000e+00> : vector<16xf32>
    %340 = vector.multi_reduction <add>, %336, %cst_121 [1] : vector<16x32xf32> to vector<16xf32>
    %341 = vector.shape_cast %340 : vector<16xf32> to vector<16x1xf32>
    %cst_122 = arith.constant 3.200000e+01 : f32
    %342 = vector.broadcast %cst_122 : f32 to vector<16x1xf32>
    %343 = arith.divf %341, %342 : vector<16x1xf32>
    %344 = vector.broadcast %343 : vector<16x1xf32> to vector<16x32xf32>
    %345 = arith.subf %336, %344 : vector<16x32xf32>
    %346 = arith.mulf %345, %345 : vector<16x32xf32>
    %cst_123 = arith.constant dense<0.000000e+00> : vector<16xf32>
    %347 = vector.multi_reduction <add>, %346, %cst_123 [1] : vector<16x32xf32> to vector<16xf32>
    %348 = vector.shape_cast %347 : vector<16xf32> to vector<16x1xf32>
    %cst_124 = arith.constant 3.200000e+01 : f32
    %349 = vector.broadcast %cst_124 : f32 to vector<16x1xf32>
    %350 = arith.divf %348, %349 : vector<16x1xf32>
    %cst_125 = arith.constant 9.99999974E-6 : f32
    %351 = vector.broadcast %cst_125 : f32 to vector<16x1xf32>
    %352 = arith.addf %350, %351 : vector<16x1xf32>
    %353 = math.rsqrt %352 : vector<16x1xf32>
    %354 = vector.broadcast %353 : vector<16x1xf32> to vector<16x32xf32>
    %355 = arith.mulf %345, %354 : vector<16x32xf32>
    %356 = vector.broadcast %337 : vector<1x32xf32> to vector<16x32xf32>
    %357 = arith.mulf %355, %356 : vector<16x32xf32>
    %358 = vector.broadcast %338 : vector<1x32xf32> to vector<16x32xf32>
    %359 = arith.addf %357, %358 : vector<16x32xf32>
    %c0_126 = arith.constant 0 : index
    %c0_127 = arith.constant 0 : index
    %360 = vector.load %arg7[%c0_126, %c0_127] : memref<32x10xf32, #tpu.memory_space<vmem>>, vector<32x10xf32>
    %cst_128 = arith.constant dense<0.000000e+00> : vector<16x10xf32>
    %361 = tpu.matmul %359, %360, %cst_128 {dimension_numbers = #tpu.dot_dimension_numbers<[1], [0], [0], [1], [0, 0, 1, 1], [], []>} : vector<16x32xf32>, vector<32x10xf32>, vector<16x10xf32> -> vector<16x10xf32>
    %362 = vector.broadcast %339 : vector<1x10xf32> to vector<16x10xf32>
    %363 = arith.addf %361, %362 : vector<16x10xf32>
    %364 = vector.extract_strided_slice %363 {offsets = [0, 0], sizes = [1, 10], strides = [1, 1]} : vector<16x10xf32> to vector<1x10xf32>
    %c0_129 = arith.constant 0 : index
    %c0_130 = arith.constant 0 : index
    %365 = vector.load %arg9[%c0_129, %c0_130] : memref<2x10xf32, #tpu.memory_space<vmem>>, vector<1x10xf32>
    tpu.vector_store %arg9[%c0_129, %c0_130], %364 {strides = array<i32>} : memref<2x10xf32, #tpu.memory_space<vmem>>, vector<1x10xf32>,
    %366 = vector.extract_strided_slice %363 {offsets = [5, 0], sizes = [1, 10], strides = [1, 1]} : vector<16x10xf32> to vector<1x10xf32>
    %c1_131 = arith.constant 1 : index
    %c0_132 = arith.constant 0 : index
    %367 = vector.load %arg9[%c1_131, %c0_132] : memref<2x10xf32, #tpu.memory_space<vmem>>, vector<1x10xf32>
    tpu.vector_store %arg9[%c1_131, %c0_132], %366 {strides = array<i32>} : memref<2x10xf32, #tpu.memory_space<vmem>>, vector<1x10xf32>,
    return
  }
}

</mosaic_0001>

<llo_original>
// kernel: vit_forward_pallas.1
$region0: #{vit_forward_pallas.1}
  #allocation0 [shape = 'u32[]', space=smem, size = 0x4, offset = 0x4, fixed_abs, tag = 'smem constant byte address 0x4 - core index']
  #allocation1 [shape = 'u32[72,128]{1,0:T(1,128)}', space=vmem, size = 0x9000, scoped, tag = 'internal scratch']
  %s0 = inlined_call_operand.vmem [shape: bf16[16,192], index: 0, kind: input, shape index: {}]
  %s1 = inlined_call_operand.vmem [shape: f32[16,32], index: 1, kind: input, shape index: {}]
  %s2 = inlined_call_operand.vmem [shape: bf16[192,32], index: 2, kind: input, shape index: {}]
  %s3 = inlined_call_operand.vmem [shape: bf16[2,32,96], index: 3, kind: input, shape index: {}]
  %s4 = inlined_call_operand.vmem [shape: bf16[2,32,32], index: 4, kind: input, shape index: {}]
  %s5 = inlined_call_operand.vmem [shape: bf16[2,32,128], index: 5, kind: input, shape index: {}]
  %s6 = inlined_call_operand.vmem [shape: bf16[2,128,32], index: 6, kind: input, shape index: {}]
  %s7 = inlined_call_operand.vmem [shape: f32[32,10], index: 7, kind: input, shape index: {}]
  %s8 = inlined_call_operand.vmem [shape: f32[17,128], index: 8, kind: input, shape index: {}]
  %s9 = inlined_call_operand.hbm [shape: f32[2,10], index: 9, kind: output, shape index: {}]
  %s10 = sld [smem:[#allocation0]]
  $region46: #{vit_forward_pallas.1} parent=0
    _
  %s12 = ssub.s32 1, %s10
  %s13 = scalar_select 0, %s12, %s10
  $region1: #{vit_forward_pallas.1} parent=0
    #allocation2 [shape = 'u8[1024]{0}', space=vmem, size = 0x400, scoped, tag = 'output window, operand 0, single buffered']
    #allocation3 [shape = 's32[1]{0}', space=sflag, size = 0x4, scoped, tag = 'scoped memory for vit_forward_pallas.1']
    %14 = vsyncpa [#allocation3], 0
    // Predicated region
    $region2: #{vit_forward_pallas.1} parent=1 // pred_check
      _
    $region3: #{vit_forward_pallas.1} parent=1 // pred_check_branch
      %16 = sbr.rel (0) target = $region5
    $region4: #{vit_forward_pallas.1} parent=1 // pred_region
      _
    $region5: #{vit_forward_pallas.1} parent=1 // pred_fallthru
      _
    // Predicated region
    $region6: #{vit_forward_pallas.1} parent=1 // pred_check
      _
    $region7: #{vit_forward_pallas.1} parent=1 // pred_check_branch
      %18 = sbr.rel (0) target = $region9
    $region8: #{vit_forward_pallas.1} parent=1 // pred_region
      _
    $region9: #{vit_forward_pallas.1} parent=1 // pred_fallthru
      _
    // Predicated region
    $region10: #{vit_forward_pallas.1} parent=1 // pred_check
      _
    $region11: #{vit_forward_pallas.1} parent=1 // pred_check_branch
      %20 = sbr.rel (0) target = $region13
    $region12: #{vit_forward_pallas.1} parent=1 // pred_region
      _
    $region13: #{vit_forward_pallas.1} parent=1 // pred_fallthru
      _
    // Predicated region
    $region14: #{vit_forward_pallas.1} parent=1 // pred_check
      _
    $region15: #{vit_forward_pallas.1} parent=1 // pred_check_branch
      %22 = sbr.rel (0) target = $region17
    $region16: #{vit_forward_pallas.1} parent=1 // pred_region
      _
    $region17: #{vit_forward_pallas.1} parent=1 // pred_fallthru
      _
    // Predicated region
    $region18: #{vit_forward_pallas.1} parent=1 // pred_check
      _
    $region19: #{vit_forward_pallas.1} parent=1 // pred_check_branch
      %24 = sbr.rel (0) target = $region21
    $region20: #{vit_forward_pallas.1} parent=1 // pred_region
      _
    $region21: #{vit_forward_pallas.1} parent=1 // pred_fallthru
      _
    // Predicated region
    $region22: #{vit_forward_pallas.1} parent=1 // pred_check
      _
    $region23: #{vit_forward_pallas.1} parent=1 // pred_check_branch
      %26 = sbr.rel (0) target = $region25
    $region24: #{vit_forward_pallas.1} parent=1 // pred_region
      _
    $region25: #{vit_forward_pallas.1} parent=1 // pred_fallthru
      _
    // Predicated region
    $region26: #{vit_forward_pallas.1} parent=1 // pred_check
      _
    $region27: #{vit_forward_pallas.1} parent=1 // pred_check_branch
      %28 = sbr.rel (0) target = $region29
    $region28: #{vit_forward_pallas.1} parent=1 // pred_region
      _
    $region29: #{vit_forward_pallas.1} parent=1 // pred_fallthru
      _
    // Predicated region
    $region30: #{vit_forward_pallas.1} parent=1 // pred_check
      _
    $region31: #{vit_forward_pallas.1} parent=1 // pred_check_branch
      %30 = sbr.rel (0) target = $region33
    $region32: #{vit_forward_pallas.1} parent=1 // pred_region
      _
    $region33: #{vit_forward_pallas.1} parent=1 // pred_fallthru
      _
    // Predicated region
    $region34: #{vit_forward_pallas.1} parent=1 // pred_check
      _
    $region35: #{vit_forward_pallas.1} parent=1 // pred_check_branch
      %32 = sbr.rel (0) target = $region37
    $region36: #{vit_forward_pallas.1} parent=1 // pred_region
      _
    $region37: #{vit_forward_pallas.1} parent=1 // pred_fallthru
      _
    %v34 = vlaneseq
    %v35 = vshrl.u32 %v34, 7
    %v36 = vadd.s32 %v35, 8
    %v37 = vlaneseq
    %v38 = vand.u32 %v37, 127
    %vm39 = vcmp.ge.s32.totalorder %v35, 5
    %vm40 = vcmp.ge.s32.totalorder %v36, 5
    %v41 = vsel %vm39, 1, 0
    %v42 = vsel %vm40, 1, 0
    %vm43 = vcmp.lt.s32.totalorder %v35, 10
    %vm44 = vcmp.lt.s32.totalorder %v36, 10
    %v45 = vsel %vm43, %v41, 4294967295
    %v46 = vsel %vm44, %v42, 4294967295
    %vm47 = vcmp.ge.s32.totalorder %v38, 5
    %v48 = vsel %vm47, 1, 0
    %vm49 = vcmp.lt.s32.totalorder %v38, 10
    %v50 = vsel %vm49, %v48, 4294967295
    %vm51 = vcmp.eq.s32.totalorder %v45, %v50
    %vm52 = vcmp.eq.s32.totalorder %v46, %v50
    %v53 = vsel %vm51, 0.0, -1e+09
    %v54 = vsel %vm52, 0.0, -1e+09
    %v55 = vld [vmem:[%s0] sm:$0xff]
    %v56 = vld [vmem:[%s0 + $0x8] sm:$0xff]
    %v57 = vld [vmem:[%s2] sm:$0xf]
    %v58 = vld [vmem:[%s2 + $0x4] sm:$0xf]
    %v59 = vld [vmem:[%s2 + $0x8] sm:$0xf]
    %v60 = vld [vmem:[%s2 + $0xc] sm:$0xf]
    %v61 = vld [vmem:[%s2 + $0x10] sm:$0xf]
    %v62 = vld [vmem:[%s2 + $0x14] sm:$0xf]
    %v63 = vld [vmem:[%s2 + $0x18] sm:$0xf]
    %v64 = vld [vmem:[%s2 + $0x1c] sm:$0xf]
    %v65 = vld [vmem:[%s2 + $0x20] sm:$0xf]
    %v66 = vld [vmem:[%s2 + $0x24] sm:$0xf]
    %v67 = vld [vmem:[%s2 + $0x28] sm:$0xf]
    %v68 = vld [vmem:[%s2 + $0x2c] sm:$0xf]
    %v69 = vld [vmem:[%s2 + $0x30] sm:$0xf]
    %v70 = vld [vmem:[%s2 + $0x34] sm:$0xf]
    %v71 = vld [vmem:[%s2 + $0x38] sm:$0xf]
    %v72 = vld [vmem:[%s2 + $0x3c] sm:$0xf]
    %v73 = vld [vmem:[%s2 + $0x40] sm:$0xf]
    %v74 = vld [vmem:[%s2 + $0x44] sm:$0xf]
    %v75 = vld [vmem:[%s2 + $0x48] sm:$0xf]
    %v76 = vld [vmem:[%s2 + $0x4c] sm:$0xf]
    %v77 = vld [vmem:[%s2 + $0x50] sm:$0xf]
    %v78 = vld [vmem:[%s2 + $0x54] sm:$0xf]
    %v79 = vld [vmem:[%s2 + $0x58] sm:$0xf]
    %v80 = vld [vmem:[%s2 + $0x5c] sm:$0xf]
    %v81 = vld [vmem:[%s1] sm:$0xff]
    %v82 = vld [vmem:[%s1 + $0x8] sm:$0xff]
    %v85 = vunpack.c.l.b16 %v55
    %v86 = vunpack.c.h.b16 %v55
    %v87 = vunpack.c.l.b16 %v56
    %v88 = vunpack.c.h.b16 %v56
    %v89 = vpack.c.b16 %v87, %v85
    %v90 = vpack.c.b16 %v88, %v86
    %v116 = vunpack.c.l.b16 %v57
    %v117 = vunpack.c.l.b16 %v58
    %v118 = vunpack.c.l.b16 %v59
    %v119 = vunpack.c.l.b16 %v60
    %v120 = vunpack.c.l.b16 %v61
    %v121 = vunpack.c.l.b16 %v62
    %v122 = vunpack.c.l.b16 %v63
    %v123 = vunpack.c.l.b16 %v64
    %v124 = vunpack.c.l.b16 %v65
    %v125 = vunpack.c.l.b16 %v66
    %v126 = vunpack.c.l.b16 %v67
    %v127 = vunpack.c.l.b16 %v68
    %v128 = vunpack.c.l.b16 %v69
    %v129 = vunpack.c.l.b16 %v70
    %v130 = vunpack.c.l.b16 %v71
    %v131 = vunpack.c.l.b16 %v72
    %v132 = vunpack.c.l.b16 %v73
    %v133 = vunpack.c.l.b16 %v74
    %v134 = vunpack.c.l.b16 %v75
    %v135 = vunpack.c.l.b16 %v76
    %v136 = vunpack.c.l.b16 %v77
    %v137 = vunpack.c.l.b16 %v78
    %v138 = vunpack.c.l.b16 %v79
    %v139 = vunpack.c.l.b16 %v80
    %v140 = vpack.c.b16 %v117, %v116
    %v141 = vpack.c.b16 %v119, %v118
    %v142 = vpack.c.b16 %v121, %v120
    %v143 = vpack.c.b16 %v123, %v122
    %v144 = vpack.c.b16 %v125, %v124
    %v145 = vpack.c.b16 %v127, %v126
    %v146 = vpack.c.b16 %v129, %v128
    %v147 = vpack.c.b16 %v131, %v130
    %v148 = vpack.c.b16 %v133, %v132
    %v149 = vpack.c.b16 %v135, %v134
    %v150 = vpack.c.b16 %v137, %v136
    %v151 = vpack.c.b16 %v139, %v138
    %vm164 = vcmask 523264
    %v166 = vsel %vm164, %v90, 0
    %168 = vmatpush.bf16.msra.mxu0 %v147
    %169 = vmatpush.bf16.msra.mxu0 %v146
    %170 = vmatpush.bf16.msra.mxu0 %v145
    %171 = vmatpush.bf16.msra.mxu0 %v144
    %172 = vmatpush.bf16.msra.mxu0 %v143
    %173 = vmatpush.bf16.msra.mxu0 %v142
    %174 = vmatpush.bf16.msra.mxu0 %v141
    %175 = vmatpush.bf16.msra.mxu0 %v140
    %176 = vmatmul.bf16.gmra.mxu0 %v89
    %v177 = vpop.f32.mrf.mxu0
    %v178 = vadd.f32 %v81, %v177
    %v179 = vpop.f32.mrf.mxu0
    %v180 = vadd.f32 %v82, %v179
    %181 = vdwg.mxu0
    %182 = vmatpush.bf16.msra.mxu0 0
    %183 = vmatpush.bf16.msra.mxu0 0
    %184 = vmatpush.bf16.msra.mxu0 0
    %185 = vmatpush.bf16.msra.mxu0 0
    %186 = vmatpush.bf16.msra.mxu0 %v151
    %187 = vmatpush.bf16.msra.mxu0 %v150
    %188 = vmatpush.bf16.msra.mxu0 %v149
    %189 = vmatpush.bf16.msra.mxu0 %v148
    %190 = vmatmul.bf16.gmra.mxu0 %v166
    %v191 = vpop.f32.mrf.mxu0
    %v192 = vadd.f32 %v178, %v191
    %v193 = vpop.f32.mrf.mxu0
    %v194 = vadd.f32 %v180, %v193
    %195 = vdwg.mxu0
    %v196 = vld [vmem:[%s8] sm:$0x1]
    %v197 = vld [vmem:[%s8 + $0x1] sm:$0x1]
    %v198 = vld [vmem:[%s8 + $0x2] sm:$0x1]
    %v199 = vld [vmem:[%s8 + $0x3] sm:$0x1]
    %v200 = vld [vmem:[%s8 + $0x4] sm:$0x1]
    %v201 = vld [vmem:[%s8 + $0x5] sm:$0x1]
    %v202 = vld [vmem:[%s8 + $0x6] sm:$0x1]
    %vm203 = vcmask 261120
    %v204 = vsel %vm203, %v192, 0.0
    %205 = vadd.xlane.f32.xlu0 %v204
    %v206 = vpop.xlane.xlu0 %205
    %v207 = vsel %vm203, %v194, 0.0
    %208 = vadd.xlane.f32.xlu0 %v207
    %v209 = vpop.xlane.xlu0 %208
    %v210 = vrcp.pop 32.0
    %v211 = vmul.f32 32.0, %v210
    %v212 = vsub.f32 1.0, %v211
    %v213 = vmul.f32 %v210, %v212
    %v214 = vadd.f32 %v210, %v213
    %vm215 = vweird.f32 %v210
    %v216 = vsel %vm215, %v210, %v214
    %v217 = vmul.f32 %v206, %v216
    %v218 = vmul.f32 %v209, %v216
    %v219 = vsub.f32 %v192, %v217
    %v220 = vsub.f32 %v194, %v218
    %v221 = vmul.f32 %v219, %v219
    %v222 = vmul.f32 %v220, %v220
    %v223 = vsel %vm203, %v221, 0.0
    %224 = vadd.xlane.f32.xlu0 %v223
    %v225 = vpop.xlane.xlu0 %224
    %v226 = vsel %vm203, %v222, 0.0
    %227 = vadd.xlane.f32.xlu0 %v226
    %v228 = vpop.xlane.xlu0 %227
    %v229 = vmul.f32 %v225, %v216
    %v230 = vmul.f32 %v228, %v216
    %v231 = vadd.f32 %v229, 1e-05
    %v232 = vadd.f32 %v230, 1e-05
    %v233 = vrsqrt.pop %v231
    %v234 = vmul.f32 %v233, %v231
    %v235 = vmul.f32 %v234, %v233
    %v236 = vmul.f32 0.5, %v235
    %v237 = vsub.f32 1.5, %v236
    %v238 = vmul.f32 %v233, %v237
    %vm239 = vweird.f32 %v231
    %vm240 = vweird.f32 %v233
    %vm241 = vmor %vm239, %vm240
    %v242 = vsel %vm241, %v233, %v238
    %v243 = vrsqrt.pop %v232
    %v244 = vmul.f32 %v243, %v232
    %v245 = vmul.f32 %v244, %v243
    %v246 = vmul.f32 0.5, %v245
    %v247 = vsub.f32 1.5, %v246
    %v248 = vmul.f32 %v243, %v247
    %vm249 = vweird.f32 %v232
    %vm250 = vweird.f32 %v243
    %vm251 = vmor %vm249, %vm250
    %v252 = vsel %vm251, %v243, %v248
    %v253 = vmul.f32 %v219, %v242
    %v254 = vmul.f32 %v220, %v252
    %v255 = vperm.slane %v196, 0
    %v256 = vmul.f32 %v253, %v255
    %v257 = vmul.f32 %v254, %v255
    %v258 = vperm.slane %v197, 0
    %v259 = vadd.f32 %v256, %v258
    %v260 = vadd.f32 %v257, %v258
    %v261 = vpack.c.bf16 %v260, %v259
    %v262 = vld [vmem:[%s3] sm:$0xf]
    %v263 = vld [vmem:[%s3 + $0x4] sm:$0xf]
    %v264 = vld [vmem:[%s3 + $0x8] sm:$0xf]
    %v265 = vld [vmem:[%s3 + $0xc] sm:$0xf]
    %v270 = vunpack.c.l.b16 %v262
    %v271 = vunpack.c.l.b16 %v263
    %v272 = vunpack.c.l.b16 %v264
    %v273 = vunpack.c.l.b16 %v265
    %v274 = vpack.c.b16 %v271, %v270
    %v275 = vpack.c.b16 %v273, %v272
    %v279 = vsel %vm203, %v261, 0
    %281 = vmatpush.bf16.msra.mxu0 0
    %282 = vmatpush.bf16.msra.mxu0 0
    %283 = vmatpush.bf16.msra.mxu0 0
    %284 = vmatpush.bf16.msra.mxu0 0
    %285 = vmatpush.bf16.msra.mxu0 0
    %286 = vmatpush.bf16.msra.mxu0 0
    %287 = vmatpush.bf16.msra.mxu0 %v275
    %288 = vmatpush.bf16.msra.mxu0 %v274
    %289 = vmatmul.bf16.gmra.mxu0 %v279
    %v290 = vpop.f32.mrf.mxu0
    %v291 = vadd.f32 0.0, %v290
    %v292 = vpop.f32.mrf.mxu0
    %v293 = vadd.f32 0.0, %v292
    %294 = vdwg.mxu0
    %v295 = vpack.c.bf16 %v291, %v291
    %v296 = vpack.c.bf16 %v293, %v293
    %v299 = vunpack.c.l.b16 %v295
    %v300 = vunpack.c.l.b16 %v296
    %v301 = vpack.c.b16 %v300, %v299
    %302 = vrot.lane.b32.xlu0 %v301, 96
    %v303 = vpop.permute.xlu0 %302
    %vm304 = vcmask 64512
    %v306 = vsel %vm304, %v301, 0
    %v309 = vsel %vm304, %v303, 0
    %311 = vmatpush.bf16.xpose.msra.mxu0 0
    %312 = vmatpush.bf16.xpose.msra.mxu0 0
    %313 = vmatpush.bf16.xpose.msra.mxu0 0
    %314 = vmatpush.bf16.xpose.msra.mxu0 0
    %315 = vmatpush.bf16.xpose.msra.mxu0 0
    %316 = vmatpush.bf16.xpose.msra.mxu0 0
    %317 = vmatpush.bf16.xpose.msra.mxu0 0
    %318 = vmatpush.bf16.xpose.msra.mxu0 %v309
    %319 = vmatmul.bf16.gmra.mxu0 %v306
    %v320 = vpop.f32.mrf.mxu0
    %v321 = vadd.f32 %v53, %v320
    %v322 = vpop.f32.mrf.mxu0
    %v323 = vadd.f32 %v54, %v322
    %324 = vdwg.mxu0
    %vm325 = vcmask 130048
    %v326 = vsel %vm325, %v321, -inf
    %327 = vmax.xlane.f32.xlu0 %v326
    %v328 = vpop.xlane.xlu0 %327
    %v329 = vsel %vm325, %v323, -inf
    %330 = vmax.xlane.f32.xlu0 %v329
    %v331 = vpop.xlane.xlu0 %330
    %v332 = vsub.f32 %v321, %v328
    %v333 = vsub.f32 %v323, %v331
    %v334 = vmul.f32 %v332, 1.442695
    %v335 = vpow.pop %v334
    %v336 = vmul.f32 %v333, 1.442695
    %v337 = vpow.pop %v336
    %v338 = vsel %vm325, %v335, 0.0
    %339 = vadd.xlane.f32.xlu0 %v338
    %v340 = vpop.xlane.xlu0 %339
    %v341 = vsel %vm325, %v337, 0.0
    %342 = vadd.xlane.f32.xlu0 %v341
    %v343 = vpop.xlane.xlu0 %342
    %v344 = vrcp.pop %v340
    %v345 = vrcp.pop %v343
    %v346 = vmul.f32 %v335, %v344
    %v347 = vmul.f32 %v337, %v345
    %v348 = vpack.c.bf16 %v347, %v346
    %349 = vrot.lane.b32.xlu0 %v301, 64
    %v350 = vpop.permute.xlu0 %349
    %v353 = vsel %vm325, %v348, 0
    %355 = vmatpush.bf16.msra.mxu0 0
    %356 = vmatpush.bf16.msra.mxu0 0
    %357 = vmatpush.bf16.msra.mxu0 0
    %358 = vmatpush.bf16.msra.mxu0 0
    %359 = vmatpush.bf16.msra.mxu0 0
    %360 = vmatpush.bf16.msra.mxu0 0
    %361 = vmatpush.bf16.msra.mxu0 0
    %362 = vmatpush.bf16.msra.mxu0 %v350
    %363 = vmatmul.bf16.gmra.mxu0 %v353
    %v364 = vpop.f32.mrf.mxu0
    %v365 = vadd.f32 0.0, %v364
    %v366 = vpop.f32.mrf.mxu0
    %v367 = vadd.f32 0.0, %v366
    %368 = vdwg.mxu0
    %369 = vrot.lane.b32.xlu0 %v301, 120
    %v370 = vpop.permute.xlu0 %369
    %371 = vrot.lane.b32.xlu0 %v301, 88
    %v372 = vpop.permute.xlu0 %371
    %v374 = vsel %vm304, %v370, 0
    %v377 = vsel %vm304, %v372, 0
    %379 = vmatpush.bf16.xpose.msra.mxu0 0
    %380 = vmatpush.bf16.xpose.msra.mxu0 0
    %381 = vmatpush.bf16.xpose.msra.mxu0 0
    %382 = vmatpush.bf16.xpose.msra.mxu0 0
    %383 = vmatpush.bf16.xpose.msra.mxu0 0
    %384 = vmatpush.bf16.xpose.msra.mxu0 0
    %385 = vmatpush.bf16.xpose.msra.mxu0 0
    %386 = vmatpush.bf16.xpose.msra.mxu0 %v377
    %387 = vmatmul.bf16.gmra.mxu0 %v374
    %v388 = vpop.f32.mrf.mxu0
    %v389 = vadd.f32 %v53, %v388
    %v390 = vpop.f32.mrf.mxu0
    %v391 = vadd.f32 %v54, %v390
    %392 = vdwg.mxu0
    %v393 = vsel %vm325, %v389, -inf
    %394 = vmax.xlane.f32.xlu0 %v393
    %v395 = vpop.xlane.xlu0 %394
    %v396 = vsel %vm325, %v391, -inf
    %397 = vmax.xlane.f32.xlu0 %v396
    %v398 = vpop.xlane.xlu0 %397
    %v399 = vsub.f32 %v389, %v395
    %v400 = vsub.f32 %v391, %v398
    %v401 = vmul.f32 %v399, 1.442695
    %v402 = vpow.pop %v401
    %v403 = vmul.f32 %v400, 1.442695
    %v404 = vpow.pop %v403
    %v405 = vsel %vm325, %v402, 0.0
    %406 = vadd.xlane.f32.xlu0 %v405
    %v407 = vpop.xlane.xlu0 %406
    %v408 = vsel %vm325, %v404, 0.0
    %409 = vadd.xlane.f32.xlu0 %v408
    %v410 = vpop.xlane.xlu0 %409
    %v411 = vrcp.pop %v407
    %v412 = vrcp.pop %v410
    %v413 = vmul.f32 %v402, %v411
    %v414 = vmul.f32 %v404, %v412
    %v415 = vpack.c.bf16 %v414, %v413
    %416 = vrot.lane.b32.xlu0 %v301, 56
    %v417 = vpop.permute.xlu0 %416
    %v420 = vsel %vm325, %v415, 0
    %422 = vmatpush.bf16.msra.mxu0 0
    %423 = vmatpush.bf16.msra.mxu0 0
    %424 = vmatpush.bf16.msra.mxu0 0
    %425 = vmatpush.bf16.msra.mxu0 0
    %426 = vmatpush.bf16.msra.mxu0 0
    %427 = vmatpush.bf16.msra.mxu0 0
    %428 = vmatpush.bf16.msra.mxu0 0
    %429 = vmatpush.bf16.msra.mxu0 %v417
    %430 = vmatmul.bf16.gmra.mxu0 %v420
    %v431 = vpop.f32.mrf.mxu0
    %v432 = vadd.f32 0.0, %v431
    %v433 = vpop.f32.mrf.mxu0
    %v434 = vadd.f32 0.0, %v433
    %435 = vdwg.mxu0
    %436 = vrot.lane.b32.xlu0 %v301, 112
    %v437 = vpop.permute.xlu0 %436
    %438 = vrot.lane.b32.xlu0 %v301, 80
    %v439 = vpop.permute.xlu0 %438
    %v441 = vsel %vm304, %v437, 0
    %v444 = vsel %vm304, %v439, 0
    %446 = vmatpush.bf16.xpose.msra.mxu0 0
    %447 = vmatpush.bf16.xpose.msra.mxu0 0
    %448 = vmatpush.bf16.xpose.msra.mxu0 0
    %449 = vmatpush.bf16.xpose.msra.mxu0 0
    %450 = vmatpush.bf16.xpose.msra.mxu0 0
    %451 = vmatpush.bf16.xpose.msra.mxu0 0
    %452 = vmatpush.bf16.xpose.msra.mxu0 0
    %453 = vmatpush.bf16.xpose.msra.mxu0 %v444
    %454 = vmatmul.bf16.gmra.mxu0 %v441
    %v455 = vpop.f32.mrf.mxu0
    %v456 = vadd.f32 %v53, %v455
    %v457 = vpop.f32.mrf.mxu0
    %v458 = vadd.f32 %v54, %v457
    %459 = vdwg.mxu0
    %v460 = vsel %vm325, %v456, -inf
    %461 = vmax.xlane.f32.xlu0 %v460
    %v462 = vpop.xlane.xlu0 %461
    %v463 = vsel %vm325, %v458, -inf
    %464 = vmax.xlane.f32.xlu0 %v463
    %v465 = vpop.xlane.xlu0 %464
    %v466 = vsub.f32 %v456, %v462
    %v467 = vsub.f32 %v458, %v465
    %v468 = vmul.f32 %v466, 1.442695
    %v469 = vpow.pop %v468
    %v470 = vmul.f32 %v467, 1.442695
    %v471 = vpow.pop %v470
    %v472 = vsel %vm325, %v469, 0.0
    %473 = vadd.xlane.f32.xlu0 %v472
    %v474 = vpop.xlane.xlu0 %473
    %v475 = vsel %vm325, %v471, 0.0
    %476 = vadd.xlane.f32.xlu0 %v475
    %v477 = vpop.xlane.xlu0 %476
    %v478 = vrcp.pop %v474
    %v479 = vrcp.pop %v477
    %v480 = vmul.f32 %v469, %v478
    %v481 = vmul.f32 %v471, %v479
    %v482 = vpack.c.bf16 %v481, %v480
    %483 = vrot.lane.b32.xlu0 %v301, 48
    %v484 = vpop.permute.xlu0 %483
    %v487 = vsel %vm325, %v482, 0
    %489 = vmatpush.bf16.msra.mxu0 0
    %490 = vmatpush.bf16.msra.mxu0 0
    %491 = vmatpush.bf16.msra.mxu0 0
    %492 = vmatpush.bf16.msra.mxu0 0
    %493 = vmatpush.bf16.msra.mxu0 0
    %494 = vmatpush.bf16.msra.mxu0 0
    %495 = vmatpush.bf16.msra.mxu0 0
    %496 = vmatpush.bf16.msra.mxu0 %v484
    %497 = vmatmul.bf16.gmra.mxu0 %v487
    %v498 = vpop.f32.mrf.mxu0
    %v499 = vadd.f32 0.0, %v498
    %v500 = vpop.f32.mrf.mxu0
    %v501 = vadd.f32 0.0, %v500
    %502 = vdwg.mxu0
    %503 = vrot.lane.b32.xlu0 %v301, 104
    %v504 = vpop.permute.xlu0 %503
    %505 = vrot.lane.b32.xlu0 %v301, 72
    %v506 = vpop.permute.xlu0 %505
    %v508 = vsel %vm304, %v504, 0
    %v511 = vsel %vm304, %v506, 0
    %513 = vmatpush.bf16.xpose.msra.mxu0 0
    %514 = vmatpush.bf16.xpose.msra.mxu0 0
    %515 = vmatpush.bf16.xpose.msra.mxu0 0
    %516 = vmatpush.bf16.xpose.msra.mxu0 0
    %517 = vmatpush.bf16.xpose.msra.mxu0 0
    %518 = vmatpush.bf16.xpose.msra.mxu0 0
    %519 = vmatpush.bf16.xpose.msra.mxu0 0
    %520 = vmatpush.bf16.xpose.msra.mxu0 %v511
    %521 = vmatmul.bf16.gmra.mxu0 %v508
    %v522 = vpop.f32.mrf.mxu0
    %v523 = vadd.f32 %v53, %v522
    %v524 = vpop.f32.mrf.mxu0
    %v525 = vadd.f32 %v54, %v524
    %526 = vdwg.mxu0
    %v527 = vsel %vm325, %v523, -inf
    %528 = vmax.xlane.f32.xlu0 %v527
    %v529 = vpop.xlane.xlu0 %528
    %v530 = vsel %vm325, %v525, -inf
    %531 = vmax.xlane.f32.xlu0 %v530
    %v532 = vpop.xlane.xlu0 %531
    %v533 = vsub.f32 %v523, %v529
    %v534 = vsub.f32 %v525, %v532
    %v535 = vmul.f32 %v533, 1.442695
    %v536 = vpow.pop %v535
    %v537 = vmul.f32 %v534, 1.442695
    %v538 = vpow.pop %v537
    %v539 = vsel %vm325, %v536, 0.0
    %540 = vadd.xlane.f32.xlu0 %v539
    %v541 = vpop.xlane.xlu0 %540
    %v542 = vsel %vm325, %v538, 0.0
    %543 = vadd.xlane.f32.xlu0 %v542
    %v544 = vpop.xlane.xlu0 %543
    %v545 = vrcp.pop %v541
    %v546 = vrcp.pop %v544
    %v547 = vmul.f32 %v536, %v545
    %v548 = vmul.f32 %v538, %v546
    %v549 = vpack.c.bf16 %v548, %v547
    %550 = vrot.lane.b32.xlu0 %v301, 40
    %v551 = vpop.permute.xlu0 %550
    %v554 = vsel %vm325, %v549, 0
    %556 = vmatpush.bf16.msra.mxu0 0
    %557 = vmatpush.bf16.msra.mxu0 0
    %558 = vmatpush.bf16.msra.mxu0 0
    %559 = vmatpush.bf16.msra.mxu0 0
    %560 = vmatpush.bf16.msra.mxu0 0
    %561 = vmatpush.bf16.msra.mxu0 0
    %562 = vmatpush.bf16.msra.mxu0 0
    %563 = vmatpush.bf16.msra.mxu0 %v551
    %564 = vmatmul.bf16.gmra.mxu0 %v554
    %v565 = vpop.f32.mrf.mxu0
    %v566 = vadd.f32 0.0, %v565
    %v567 = vpop.f32.mrf.mxu0
    %v568 = vadd.f32 0.0, %v567
    %569 = vdwg.mxu0
    %572 = vrot.lane.b32.xlu0 %v432, 8
    %v573 = vpop.permute.xlu0 %572
    %574 = vrot.lane.b32.xlu0 %v434, 8
    %v575 = vpop.permute.xlu0 %574
    %580 = vrot.lane.b32.xlu0 %v499, 16
    %v581 = vpop.permute.xlu0 %580
    %582 = vrot.lane.b32.xlu0 %v501, 16
    %v583 = vpop.permute.xlu0 %582
    %588 = vrot.lane.b32.xlu0 %v566, 24
    %v589 = vpop.permute.xlu0 %588
    %590 = vrot.lane.b32.xlu0 %v568, 24
    %v591 = vpop.permute.xlu0 %590
    %v594 = vsel %vm304, %v365, %v573
    %v595 = vsel %vm304, %v367, %v575
    %v596 = vsel %vm325, %v594, %v581
    %v597 = vsel %vm325, %v595, %v583
    %vm598 = vcmask 195584
    %v599 = vsel %vm598, %v596, %v589
    %v600 = vsel %vm598, %v597, %v591
    %v601 = vpack.c.bf16 %v600, %v599
    %v602 = vld [vmem:[%s4] sm:$0xf]
    %v603 = vld [vmem:[%s4 + $0x4] sm:$0xf]
    %v604 = vld [vmem:[%s4 + $0x8] sm:$0xf]
    %v605 = vld [vmem:[%s4 + $0xc] sm:$0xf]
    %v610 = vunpack.c.l.b16 %v602
    %v611 = vunpack.c.l.b16 %v603
    %v612 = vunpack.c.l.b16 %v604
    %v613 = vunpack.c.l.b16 %v605
    %v614 = vpack.c.b16 %v611, %v610
    %v615 = vpack.c.b16 %v613, %v612
    %v619 = vsel %vm203, %v601, 0
    %621 = vmatpush.bf16.msra.mxu0 0
    %622 = vmatpush.bf16.msra.mxu0 0
    %623 = vmatpush.bf16.msra.mxu0 0
    %624 = vmatpush.bf16.msra.mxu0 0
    %625 = vmatpush.bf16.msra.mxu0 0
    %626 = vmatpush.bf16.msra.mxu0 0
    %627 = vmatpush.bf16.msra.mxu0 %v615
    %628 = vmatpush.bf16.msra.mxu0 %v614
    %629 = vmatmul.bf16.gmra.mxu0 %v619
    %v630 = vpop.f32.mrf.mxu0
    %v631 = vadd.f32 0.0, %v630
    %v632 = vpop.f32.mrf.mxu0
    %v633 = vadd.f32 0.0, %v632
    %634 = vdwg.mxu0
    %v635 = vadd.f32 %v192, %v631
    %v636 = vadd.f32 %v194, %v633
    %v637 = vperm.slane %v200, 0
    %v638 = vadd.f32 %v635, %v637
    %v639 = vadd.f32 %v636, %v637
    %v640 = vsel %vm203, %v638, 0.0
    %641 = vadd.xlane.f32.xlu0 %v640
    %v642 = vpop.xlane.xlu0 %641
    %v643 = vsel %vm203, %v639, 0.0
    %644 = vadd.xlane.f32.xlu0 %v643
    %v645 = vpop.xlane.xlu0 %644
    %v646 = vmul.f32 %v642, %v216
    %v647 = vmul.f32 %v645, %v216
    %v648 = vsub.f32 %v638, %v646
    %v649 = vsub.f32 %v639, %v647
    %v650 = vmul.f32 %v648, %v648
    %v651 = vmul.f32 %v649, %v649
    %v652 = vsel %vm203, %v650, 0.0
    %653 = vadd.xlane.f32.xlu0 %v652
    %v654 = vpop.xlane.xlu0 %653
    %v655 = vsel %vm203, %v651, 0.0
    %656 = vadd.xlane.f32.xlu0 %v655
    %v657 = vpop.xlane.xlu0 %656
    %v658 = vmul.f32 %v654, %v216
    %v659 = vmul.f32 %v657, %v216
    %v660 = vadd.f32 %v658, 1e-05
    %v661 = vadd.f32 %v659, 1e-05
    %v662 = vrsqrt.pop %v660
    %v663 = vmul.f32 %v662, %v660
    %v664 = vmul.f32 %v663, %v662
    %v665 = vmul.f32 0.5, %v664
    %v666 = vsub.f32 1.5, %v665
    %v667 = vmul.f32 %v662, %v666
    %vm668 = vweird.f32 %v660
    %vm669 = vweird.f32 %v662
    %vm670 = vmor %vm668, %vm669
    %v671 = vsel %vm670, %v662, %v667
    %v672 = vrsqrt.pop %v661
    %v673 = vmul.f32 %v672, %v661
    %v674 = vmul.f32 %v673, %v672
    %v675 = vmul.f32 0.5, %v674
    %v676 = vsub.f32 1.5, %v675
    %v677 = vmul.f32 %v672, %v676
    %vm678 = vweird.f32 %v661
    %vm679 = vweird.f32 %v672
    %vm680 = vmor %vm678, %vm679
    %v681 = vsel %vm680, %v672, %v677
    %v682 = vmul.f32 %v648, %v671
    %v683 = vmul.f32 %v649, %v681
    %v684 = vperm.slane %v198, 0
    %v685 = vmul.f32 %v682, %v684
    %v686 = vmul.f32 %v683, %v684
    %v687 = vperm.slane %v199, 0
    %v688 = vadd.f32 %v685, %v687
    %v689 = vadd.f32 %v686, %v687
    %v690 = vpack.c.bf16 %v689, %v688
    %v691 = vld [vmem:[%s5] sm:$0xf]
    %v692 = vld [vmem:[%s5 + $0x4] sm:$0xf]
    %v693 = vld [vmem:[%s5 + $0x8] sm:$0xf]
    %v694 = vld [vmem:[%s5 + $0xc] sm:$0xf]
    %v695 = vperm.slane %v202, 0
    %v700 = vunpack.c.l.b16 %v691
    %v701 = vunpack.c.l.b16 %v692
    %v702 = vunpack.c.l.b16 %v693
    %v703 = vunpack.c.l.b16 %v694
    %v704 = vpack.c.b16 %v701, %v700
    %v705 = vpack.c.b16 %v703, %v702
    %v709 = vsel %vm203, %v690, 0
    %711 = vmatpush.bf16.msra.mxu0 0
    %712 = vmatpush.bf16.msra.mxu0 0
    %713 = vmatpush.bf16.msra.mxu0 0
    %714 = vmatpush.bf16.msra.mxu0 0
    %715 = vmatpush.bf16.msra.mxu0 0
    %716 = vmatpush.bf16.msra.mxu0 0
    %717 = vmatpush.bf16.msra.mxu0 %v705
    %718 = vmatpush.bf16.msra.mxu0 %v704
    %719 = vmatmul.bf16.gmra.mxu0 %v709
    %v720 = vpop.f32.mrf.mxu0
    %v721 = vadd.f32 %v695, %v720
    %v722 = vpop.f32.mrf.mxu0
    %v723 = vadd.f32 %v695, %v722
    %724 = vdwg.mxu0
    %v725 = vmul.f32 %v721, %v721
    %v726 = vmul.f32 %v723, %v723
    %v727 = vmul.f32 %v721, %v725
    %v728 = vmul.f32 %v723, %v726
    %v729 = vmul.f32 %v727, 0.044715
    %v730 = vmul.f32 %v728, 0.044715
    %v731 = vadd.f32 %v721, %v729
    %v732 = vadd.f32 %v723, %v730
    %v733 = vmul.f32 %v731, 0.7978846
    %v734 = vmul.f32 %v732, 0.7978846
    %v735 = vtanh.pop %v733
    %v736 = vtanh.pop %v734
    %v737 = vadd.f32 %v735, 1.0
    %v738 = vadd.f32 %v736, 1.0
    %v739 = vmul.f32 %v737, 0.5
    %v740 = vmul.f32 %v738, 0.5
    %v741 = vmul.f32 %v721, %v739
    %v742 = vmul.f32 %v723, %v740
    %v743 = vpack.c.bf16 %v742, %v741
    %v744 = vld [vmem:[%s6] sm:$0xf]
    %v745 = vld [vmem:[%s6 + $0x4] sm:$0xf]
    %v746 = vld [vmem:[%s6 + $0x8] sm:$0xf]
    %v747 = vld [vmem:[%s6 + $0xc] sm:$0xf]
    %v748 = vld [vmem:[%s6 + $0x10] sm:$0xf]
    %v749 = vld [vmem:[%s6 + $0x14] sm:$0xf]
    %v750 = vld [vmem:[%s6 + $0x18] sm:$0xf]
    %v751 = vld [vmem:[%s6 + $0x1c] sm:$0xf]
    %v752 = vld [vmem:[%s6 + $0x20] sm:$0xf]
    %v753 = vld [vmem:[%s6 + $0x24] sm:$0xf]
    %v754 = vld [vmem:[%s6 + $0x28] sm:$0xf]
    %v755 = vld [vmem:[%s6 + $0x2c] sm:$0xf]
    %v756 = vld [vmem:[%s6 + $0x30] sm:$0xf]
    %v757 = vld [vmem:[%s6 + $0x34] sm:$0xf]
    %v758 = vld [vmem:[%s6 + $0x38] sm:$0xf]
    %v759 = vld [vmem:[%s6 + $0x3c] sm:$0xf]
    %v776 = vunpack.c.l.b16 %v744
    %v777 = vunpack.c.l.b16 %v745
    %v778 = vunpack.c.l.b16 %v746
    %v779 = vunpack.c.l.b16 %v747
    %v780 = vunpack.c.l.b16 %v748
    %v781 = vunpack.c.l.b16 %v749
    %v782 = vunpack.c.l.b16 %v750
    %v783 = vunpack.c.l.b16 %v751
    %v784 = vunpack.c.l.b16 %v752
    %v785 = vunpack.c.l.b16 %v753
    %v786 = vunpack.c.l.b16 %v754
    %v787 = vunpack.c.l.b16 %v755
    %v788 = vunpack.c.l.b16 %v756
    %v789 = vunpack.c.l.b16 %v757
    %v790 = vunpack.c.l.b16 %v758
    %v791 = vunpack.c.l.b16 %v759
    %v792 = vpack.c.b16 %v777, %v776
    %v793 = vpack.c.b16 %v779, %v778
    %v794 = vpack.c.b16 %v781, %v780
    %v795 = vpack.c.b16 %v783, %v782
    %v796 = vpack.c.b16 %v785, %v784
    %v797 = vpack.c.b16 %v787, %v786
    %v798 = vpack.c.b16 %v789, %v788
    %v799 = vpack.c.b16 %v791, %v790
    %808 = vmatpush.bf16.msra.mxu0 %v799
    %809 = vmatpush.bf16.msra.mxu0 %v798
    %810 = vmatpush.bf16.msra.mxu0 %v797
    %811 = vmatpush.bf16.msra.mxu0 %v796
    %812 = vmatpush.bf16.msra.mxu0 %v795
    %813 = vmatpush.bf16.msra.mxu0 %v794
    %814 = vmatpush.bf16.msra.mxu0 %v793
    %815 = vmatpush.bf16.msra.mxu0 %v792
    %816 = vmatmul.bf16.gmra.mxu0 %v743
    %v817 = vpop.f32.mrf.mxu0
    %v818 = vadd.f32 0.0, %v817
    %v819 = vpop.f32.mrf.mxu0
    %v820 = vadd.f32 0.0, %v819
    %821 = vdwg.mxu0
    %v822 = vadd.f32 %v638, %v818
    %v823 = vadd.f32 %v639, %v820
    %v824 = vperm.slane %v201, 0
    %v825 = vadd.f32 %v822, %v824
    %v826 = vadd.f32 %v823, %v824
    %v827 = vld [vmem:[%s8 + $0x7] sm:$0x1]
    %v828 = vld [vmem:[%s8 + $0x8] sm:$0x1]
    %v829 = vld [vmem:[%s8 + $0x9] sm:$0x1]
    %v830 = vld [vmem:[%s8 + $0xa] sm:$0x1]
    %v831 = vld [vmem:[%s8 + $0xb] sm:$0x1]
    %v832 = vld [vmem:[%s8 + $0xc] sm:$0x1]
    %v833 = vld [vmem:[%s8 + $0xd] sm:$0x1]
    %v834 = vsel %vm203, %v825, 0.0
    %835 = vadd.xlane.f32.xlu0 %v834
    %v836 = vpop.xlane.xlu0 %835
    %v837 = vsel %vm203, %v826, 0.0
    %838 = vadd.xlane.f32.xlu0 %v837
    %v839 = vpop.xlane.xlu0 %838
    %v840 = vmul.f32 %v836, %v216
    %v841 = vmul.f32 %v839, %v216
    %v842 = vsub.f32 %v825, %v840
    %v843 = vsub.f32 %v826, %v841
    %v844 = vmul.f32 %v842, %v842
    %v845 = vmul.f32 %v843, %v843
    %v846 = vsel %vm203, %v844, 0.0
    %847 = vadd.xlane.f32.xlu0 %v846
    %v848 = vpop.xlane.xlu0 %847
    %v849 = vsel %vm203, %v845, 0.0
    %850 = vadd.xlane.f32.xlu0 %v849
    %v851 = vpop.xlane.xlu0 %850
    %v852 = vmul.f32 %v848, %v216
    %v853 = vmul.f32 %v851, %v216
    %v854 = vadd.f32 %v852, 1e-05
    %v855 = vadd.f32 %v853, 1e-05
    %v856 = vrsqrt.pop %v854
    %v857 = vmul.f32 %v856, %v854
    %v858 = vmul.f32 %v857, %v856
    %v859 = vmul.f32 0.5, %v858
    %v860 = vsub.f32 1.5, %v859
    %v861 = vmul.f32 %v856, %v860
    %vm862 = vweird.f32 %v854
    %vm863 = vweird.f32 %v856
    %vm864 = vmor %vm862, %vm863
    %v865 = vsel %vm864, %v856, %v861
    %v866 = vrsqrt.pop %v855
    %v867 = vmul.f32 %v866, %v855
    %v868 = vmul.f32 %v867, %v866
    %v869 = vmul.f32 0.5, %v868
    %v870 = vsub.f32 1.5, %v869
    %v871 = vmul.f32 %v866, %v870
    %vm872 = vweird.f32 %v855
    %vm873 = vweird.f32 %v866
    %vm874 = vmor %vm872, %vm873
    %v875 = vsel %vm874, %v866, %v871
    %v876 = vmul.f32 %v842, %v865
    %v877 = vmul.f32 %v843, %v875
    %v878 = vperm.slane %v827, 0
    %v879 = vmul.f32 %v876, %v878
    %v880 = vmul.f32 %v877, %v878
    %v881 = vperm.slane %v828, 0
    %v882 = vadd.f32 %v879, %v881
    %v883 = vadd.f32 %v880, %v881
    %v884 = vpack.c.bf16 %v883, %v882
    %s885 = scalar_lea.vmem %s3, 16
    %v886 = vld [vmem:[%s885] sm:$0xf]
    %v887 = vld [vmem:[%s885 + $0x4] sm:$0xf]
    %v888 = vld [vmem:[%s885 + $0x8] sm:$0xf]
    %v889 = vld [vmem:[%s885 + $0xc] sm:$0xf]
    %v894 = vunpack.c.l.b16 %v886
    %v895 = vunpack.c.l.b16 %v887
    %v896 = vunpack.c.l.b16 %v888
    %v897 = vunpack.c.l.b16 %v889
    %v898 = vpack.c.b16 %v895, %v894
    %v899 = vpack.c.b16 %v897, %v896
    %v903 = vsel %vm203, %v884, 0
    %905 = vmatpush.bf16.msra.mxu0 0
    %906 = vmatpush.bf16.msra.mxu0 0
    %907 = vmatpush.bf16.msra.mxu0 0
    %908 = vmatpush.bf16.msra.mxu0 0
    %909 = vmatpush.bf16.msra.mxu0 0
    %910 = vmatpush.bf16.msra.mxu0 0
    %911 = vmatpush.bf16.msra.mxu0 %v899
    %912 = vmatpush.bf16.msra.mxu0 %v898
    %913 = vmatmul.bf16.gmra.mxu0 %v903
    %v914 = vpop.f32.mrf.mxu0
    %v915 = vadd.f32 0.0, %v914
    %v916 = vpop.f32.mrf.mxu0
    %v917 = vadd.f32 0.0, %v916
    %918 = vdwg.mxu0
    %v919 = vpack.c.bf16 %v915, %v915
    %v920 = vpack.c.bf16 %v917, %v917
    %v923 = vunpack.c.l.b16 %v919
    %v924 = vunpack.c.l.b16 %v920
    %v925 = vpack.c.b16 %v924, %v923
    %926 = vrot.lane.b32.xlu0 %v925, 96
    %v927 = vpop.permute.xlu0 %926
    %v929 = vsel %vm304, %v925, 0
    %v932 = vsel %vm304, %v927, 0
    %934 = vmatpush.bf16.xpose.msra.mxu0 0
    %935 = vmatpush.bf16.xpose.msra.mxu0 0
    %936 = vmatpush.bf16.xpose.msra.mxu0 0
    %937 = vmatpush.bf16.xpose.msra.mxu0 0
    %938 = vmatpush.bf16.xpose.msra.mxu0 0
    %939 = vmatpush.bf16.xpose.msra.mxu0 0
    %940 = vmatpush.bf16.xpose.msra.mxu0 0
    %941 = vmatpush.bf16.xpose.msra.mxu0 %v932
    %942 = vmatmul.bf16.gmra.mxu0 %v929
    %v943 = vpop.f32.mrf.mxu0
    %v944 = vadd.f32 %v53, %v943
    %v945 = vpop.f32.mrf.mxu0
    %v946 = vadd.f32 %v54, %v945
    %947 = vdwg.mxu0
    %v948 = vsel %vm325, %v944, -inf
    %949 = vmax.xlane.f32.xlu0 %v948
    %v950 = vpop.xlane.xlu0 %949
    %v951 = vsel %vm325, %v946, -inf
    %952 = vmax.xlane.f32.xlu0 %v951
    %v953 = vpop.xlane.xlu0 %952
    %v954 = vsub.f32 %v944, %v950
    %v955 = vsub.f32 %v946, %v953
    %v956 = vmul.f32 %v954, 1.442695
    %v957 = vpow.pop %v956
    %v958 = vmul.f32 %v955, 1.442695
    %v959 = vpow.pop %v958
    %v960 = vsel %vm325, %v957, 0.0
    %961 = vadd.xlane.f32.xlu0 %v960
    %v962 = vpop.xlane.xlu0 %961
    %v963 = vsel %vm325, %v959, 0.0
    %964 = vadd.xlane.f32.xlu0 %v963
    %v965 = vpop.xlane.xlu0 %964
    %v966 = vrcp.pop %v962
    %v967 = vrcp.pop %v965
    %v968 = vmul.f32 %v957, %v966
    %v969 = vmul.f32 %v959, %v967
    %v970 = vpack.c.bf16 %v969, %v968
    %971 = vrot.lane.b32.xlu0 %v925, 64
    %v972 = vpop.permute.xlu0 %971
    %v975 = vsel %vm325, %v970, 0
    %977 = vmatpush.bf16.msra.mxu0 0
    %978 = vmatpush.bf16.msra.mxu0 0
    %979 = vmatpush.bf16.msra.mxu0 0
    %980 = vmatpush.bf16.msra.mxu0 0
    %981 = vmatpush.bf16.msra.mxu0 0
    %982 = vmatpush.bf16.msra.mxu0 0
    %983 = vmatpush.bf16.msra.mxu0 0
    %984 = vmatpush.bf16.msra.mxu0 %v972
    %985 = vmatmul.bf16.gmra.mxu0 %v975
    %v986 = vpop.f32.mrf.mxu0
    %v987 = vadd.f32 0.0, %v986
    %v988 = vpop.f32.mrf.mxu0
    %v989 = vadd.f32 0.0, %v988
    %990 = vdwg.mxu0
    %991 = vrot.lane.b32.xlu0 %v925, 120
    %v992 = vpop.permute.xlu0 %991
    %993 = vrot.lane.b32.xlu0 %v925, 88
    %v994 = vpop.permute.xlu0 %993
    %v996 = vsel %vm304, %v992, 0
    %v999 = vsel %vm304, %v994, 0
    %1001 = vmatpush.bf16.xpose.msra.mxu0 0
    %1002 = vmatpush.bf16.xpose.msra.mxu0 0
    %1003 = vmatpush.bf16.xpose.msra.mxu0 0
    %1004 = vmatpush.bf16.xpose.msra.mxu0 0
    %1005 = vmatpush.bf16.xpose.msra.mxu0 0
    %1006 = vmatpush.bf16.xpose.msra.mxu0 0
    %1007 = vmatpush.bf16.xpose.msra.mxu0 0
    %1008 = vmatpush.bf16.xpose.msra.mxu0 %v999
    %1009 = vmatmul.bf16.gmra.mxu0 %v996
    %v1010 = vpop.f32.mrf.mxu0
    %v1011 = vadd.f32 %v53, %v1010
    %v1012 = vpop.f32.mrf.mxu0
    %v1013 = vadd.f32 %v54, %v1012
    %1014 = vdwg.mxu0
    %v1015 = vsel %vm325, %v1011, -inf
    %1016 = vmax.xlane.f32.xlu0 %v1015
    %v1017 = vpop.xlane.xlu0 %1016
    %v1018 = vsel %vm325, %v1013, -inf
    %1019 = vmax.xlane.f32.xlu0 %v1018
    %v1020 = vpop.xlane.xlu0 %1019
    %v1021 = vsub.f32 %v1011, %v1017
    %v1022 = vsub.f32 %v1013, %v1020
    %v1023 = vmul.f32 %v1021, 1.442695
    %v1024 = vpow.pop %v1023
    %v1025 = vmul.f32 %v1022, 1.442695
    %v1026 = vpow.pop %v1025
    %v1027 = vsel %vm325, %v1024, 0.0
    %1028 = vadd.xlane.f32.xlu0 %v1027
    %v1029 = vpop.xlane.xlu0 %1028
    %v1030 = vsel %vm325, %v1026, 0.0
    %1031 = vadd.xlane.f32.xlu0 %v1030
    %v1032 = vpop.xlane.xlu0 %1031
    %v1033 = vrcp.pop %v1029
    %v1034 = vrcp.pop %v1032
    %v1035 = vmul.f32 %v1024, %v1033
    %v1036 = vmul.f32 %v1026, %v1034
    %v1037 = vpack.c.bf16 %v1036, %v1035
    %1038 = vrot.lane.b32.xlu0 %v925, 56
    %v1039 = vpop.permute.xlu0 %1038
    %v1042 = vsel %vm325, %v1037, 0
    %1044 = vmatpush.bf16.msra.mxu0 0
    %1045 = vmatpush.bf16.msra.mxu0 0
    %1046 = vmatpush.bf16.msra.mxu0 0
    %1047 = vmatpush.bf16.msra.mxu0 0
    %1048 = vmatpush.bf16.msra.mxu0 0
    %1049 = vmatpush.bf16.msra.mxu0 0
    %1050 = vmatpush.bf16.msra.mxu0 0
    %1051 = vmatpush.bf16.msra.mxu0 %v1039
    %1052 = vmatmul.bf16.gmra.mxu0 %v1042
    %v1053 = vpop.f32.mrf.mxu0
    %v1054 = vadd.f32 0.0, %v1053
    %v1055 = vpop.f32.mrf.mxu0
    %v1056 = vadd.f32 0.0, %v1055
    %1057 = vdwg.mxu0
    %1058 = vrot.lane.b32.xlu0 %v925, 112
    %v1059 = vpop.permute.xlu0 %1058
    %1060 = vrot.lane.b32.xlu0 %v925, 80
    %v1061 = vpop.permute.xlu0 %1060
    %v1063 = vsel %vm304, %v1059, 0
    %v1066 = vsel %vm304, %v1061, 0
    %1068 = vmatpush.bf16.xpose.msra.mxu0 0
    %1069 = vmatpush.bf16.xpose.msra.mxu0 0
    %1070 = vmatpush.bf16.xpose.msra.mxu0 0
    %1071 = vmatpush.bf16.xpose.msra.mxu0 0
    %1072 = vmatpush.bf16.xpose.msra.mxu0 0
    %1073 = vmatpush.bf16.xpose.msra.mxu0 0
    %1074 = vmatpush.bf16.xpose.msra.mxu0 0
    %1075 = vmatpush.bf16.xpose.msra.mxu0 %v1066
    %1076 = vmatmul.bf16.gmra.mxu0 %v1063
    %v1077 = vpop.f32.mrf.mxu0
    %v1078 = vadd.f32 %v53, %v1077
    %v1079 = vpop.f32.mrf.mxu0
    %v1080 = vadd.f32 %v54, %v1079
    %1081 = vdwg.mxu0
    %v1082 = vsel %vm325, %v1078, -inf
    %1083 = vmax.xlane.f32.xlu0 %v1082
    %v1084 = vpop.xlane.xlu0 %1083
    %v1085 = vsel %vm325, %v1080, -inf
    %1086 = vmax.xlane.f32.xlu0 %v1085
    %v1087 = vpop.xlane.xlu0 %1086
    %v1088 = vsub.f32 %v1078, %v1084
    %v1089 = vsub.f32 %v1080, %v1087
    %v1090 = vmul.f32 %v1088, 1.442695
    %v1091 = vpow.pop %v1090
    %v1092 = vmul.f32 %v1089, 1.442695
    %v1093 = vpow.pop %v1092
    %v1094 = vsel %vm325, %v1091, 0.0
    %1095 = vadd.xlane.f32.xlu0 %v1094
    %v1096 = vpop.xlane.xlu0 %1095
    %v1097 = vsel %vm325, %v1093, 0.0
    %1098 = vadd.xlane.f32.xlu0 %v1097
    %v1099 = vpop.xlane.xlu0 %1098
    %v1100 = vrcp.pop %v1096
    %v1101 = vrcp.pop %v1099
    %v1102 = vmul.f32 %v1091, %v1100
    %v1103 = vmul.f32 %v1093, %v1101
    %v1104 = vpack.c.bf16 %v1103, %v1102
    %1105 = vrot.lane.b32.xlu0 %v925, 48
    %v1106 = vpop.permute.xlu0 %1105
    %v1109 = vsel %vm325, %v1104, 0
    %1111 = vmatpush.bf16.msra.mxu0 0
    %1112 = vmatpush.bf16.msra.mxu0 0
    %1113 = vmatpush.bf16.msra.mxu0 0
    %1114 = vmatpush.bf16.msra.mxu0 0
    %1115 = vmatpush.bf16.msra.mxu0 0
    %1116 = vmatpush.bf16.msra.mxu0 0
    %1117 = vmatpush.bf16.msra.mxu0 0
    %1118 = vmatpush.bf16.msra.mxu0 %v1106
    %1119 = vmatmul.bf16.gmra.mxu0 %v1109
    %v1120 = vpop.f32.mrf.mxu0
    %v1121 = vadd.f32 0.0, %v1120
    %v1122 = vpop.f32.mrf.mxu0
    %v1123 = vadd.f32 0.0, %v1122
    %1124 = vdwg.mxu0
    %1125 = vrot.lane.b32.xlu0 %v925, 104
    %v1126 = vpop.permute.xlu0 %1125
    %1127 = vrot.lane.b32.xlu0 %v925, 72
    %v1128 = vpop.permute.xlu0 %1127
    %v1130 = vsel %vm304, %v1126, 0
    %v1133 = vsel %vm304, %v1128, 0
    %1135 = vmatpush.bf16.xpose.msra.mxu0 0
    %1136 = vmatpush.bf16.xpose.msra.mxu0 0
    %1137 = vmatpush.bf16.xpose.msra.mxu0 0
    %1138 = vmatpush.bf16.xpose.msra.mxu0 0
    %1139 = vmatpush.bf16.xpose.msra.mxu0 0
    %1140 = vmatpush.bf16.xpose.msra.mxu0 0
    %1141 = vmatpush.bf16.xpose.msra.mxu0 0
    %1142 = vmatpush.bf16.xpose.msra.mxu0 %v1133
    %1143 = vmatmul.bf16.gmra.mxu0 %v1130
    %v1144 = vpop.f32.mrf.mxu0
    %v1145 = vadd.f32 %v53, %v1144
    %v1146 = vpop.f32.mrf.mxu0
    %v1147 = vadd.f32 %v54, %v1146
    %1148 = vdwg.mxu0
    %v1149 = vsel %vm325, %v1145, -inf
    %1150 = vmax.xlane.f32.xlu0 %v1149
    %v1151 = vpop.xlane.xlu0 %1150
    %v1152 = vsel %vm325, %v1147, -inf
    %1153 = vmax.xlane.f32.xlu0 %v1152
    %v1154 = vpop.xlane.xlu0 %1153
    %v1155 = vsub.f32 %v1145, %v1151
    %v1156 = vsub.f32 %v1147, %v1154
    %v1157 = vmul.f32 %v1155, 1.442695
    %v1158 = vpow.pop %v1157
    %v1159 = vmul.f32 %v1156, 1.442695
    %v1160 = vpow.pop %v1159
    %v1161 = vsel %vm325, %v1158, 0.0
    %1162 = vadd.xlane.f32.xlu0 %v1161
    %v1163 = vpop.xlane.xlu0 %1162
    %v1164 = vsel %vm325, %v1160, 0.0
    %1165 = vadd.xlane.f32.xlu0 %v1164
    %v1166 = vpop.xlane.xlu0 %1165
    %v1167 = vrcp.pop %v1163
    %v1168 = vrcp.pop %v1166
    %v1169 = vmul.f32 %v1158, %v1167
    %v1170 = vmul.f32 %v1160, %v1168
    %v1171 = vpack.c.bf16 %v1170, %v1169
    %1172 = vrot.lane.b32.xlu0 %v925, 40
    %v1173 = vpop.permute.xlu0 %1172
    %v1176 = vsel %vm325, %v1171, 0
    %1178 = vmatpush.bf16.msra.mxu0 0
    %1179 = vmatpush.bf16.msra.mxu0 0
    %1180 = vmatpush.bf16.msra.mxu0 0
    %1181 = vmatpush.bf16.msra.mxu0 0
    %1182 = vmatpush.bf16.msra.mxu0 0
    %1183 = vmatpush.bf16.msra.mxu0 0
    %1184 = vmatpush.bf16.msra.mxu0 0
    %1185 = vmatpush.bf16.msra.mxu0 %v1173
    %1186 = vmatmul.bf16.gmra.mxu0 %v1176
    %v1187 = vpop.f32.mrf.mxu0
    %v1188 = vadd.f32 0.0, %v1187
    %v1189 = vpop.f32.mrf.mxu0
    %v1190 = vadd.f32 0.0, %v1189
    %1191 = vdwg.mxu0
    %1194 = vrot.lane.b32.xlu0 %v1054, 8
    %v1195 = vpop.permute.xlu0 %1194
    %1196 = vrot.lane.b32.xlu0 %v1056, 8
    %v1197 = vpop.permute.xlu0 %1196
    %1202 = vrot.lane.b32.xlu0 %v1121, 16
    %v1203 = vpop.permute.xlu0 %1202
    %1204 = vrot.lane.b32.xlu0 %v1123, 16
    %v1205 = vpop.permute.xlu0 %1204
    %1210 = vrot.lane.b32.xlu0 %v1188, 24
    %v1211 = vpop.permute.xlu0 %1210
    %1212 = vrot.lane.b32.xlu0 %v1190, 24
    %v1213 = vpop.permute.xlu0 %1212
    %v1216 = vsel %vm304, %v987, %v1195
    %v1217 = vsel %vm304, %v989, %v1197
    %v1218 = vsel %vm325, %v1216, %v1203
    %v1219 = vsel %vm325, %v1217, %v1205
    %v1220 = vsel %vm598, %v1218, %v1211
    %v1221 = vsel %vm598, %v1219, %v1213
    %v1222 = vpack.c.bf16 %v1221, %v1220
    %s1223 = scalar_lea.vmem %s4, 16
    %v1224 = vld [vmem:[%s1223] sm:$0xf]
    %v1225 = vld [vmem:[%s1223 + $0x4] sm:$0xf]
    %v1226 = vld [vmem:[%s1223 + $0x8] sm:$0xf]
    %v1227 = vld [vmem:[%s1223 + $0xc] sm:$0xf]
    %v1232 = vunpack.c.l.b16 %v1224
    %v1233 = vunpack.c.l.b16 %v1225
    %v1234 = vunpack.c.l.b16 %v1226
    %v1235 = vunpack.c.l.b16 %v1227
    %v1236 = vpack.c.b16 %v1233, %v1232
    %v1237 = vpack.c.b16 %v1235, %v1234
    %v1241 = vsel %vm203, %v1222, 0
    %1243 = vmatpush.bf16.msra.mxu0 0
    %1244 = vmatpush.bf16.msra.mxu0 0
    %1245 = vmatpush.bf16.msra.mxu0 0
    %1246 = vmatpush.bf16.msra.mxu0 0
    %1247 = vmatpush.bf16.msra.mxu0 0
    %1248 = vmatpush.bf16.msra.mxu0 0
    %1249 = vmatpush.bf16.msra.mxu0 %v1237
    %1250 = vmatpush.bf16.msra.mxu0 %v1236
    %1251 = vmatmul.bf16.gmra.mxu0 %v1241
    %v1252 = vpop.f32.mrf.mxu0
    %v1253 = vadd.f32 0.0, %v1252
    %v1254 = vpop.f32.mrf.mxu0
    %v1255 = vadd.f32 0.0, %v1254
    %1256 = vdwg.mxu0
    %v1257 = vadd.f32 %v825, %v1253
    %v1258 = vadd.f32 %v826, %v1255
    %v1259 = vperm.slane %v831, 0
    %v1260 = vadd.f32 %v1257, %v1259
    %v1261 = vadd.f32 %v1258, %v1259
    %v1262 = vsel %vm203, %v1260, 0.0
    %1263 = vadd.xlane.f32.xlu0 %v1262
    %v1264 = vpop.xlane.xlu0 %1263
    %v1265 = vsel %vm203, %v1261, 0.0
    %1266 = vadd.xlane.f32.xlu0 %v1265
    %v1267 = vpop.xlane.xlu0 %1266
    %v1268 = vmul.f32 %v1264, %v216
    %v1269 = vmul.f32 %v1267, %v216
    %v1270 = vsub.f32 %v1260, %v1268
    %v1271 = vsub.f32 %v1261, %v1269
    %v1272 = vmul.f32 %v1270, %v1270
    %v1273 = vmul.f32 %v1271, %v1271
    %v1274 = vsel %vm203, %v1272, 0.0
    %1275 = vadd.xlane.f32.xlu0 %v1274
    %v1276 = vpop.xlane.xlu0 %1275
    %v1277 = vsel %vm203, %v1273, 0.0
    %1278 = vadd.xlane.f32.xlu0 %v1277
    %v1279 = vpop.xlane.xlu0 %1278
    %v1280 = vmul.f32 %v1276, %v216
    %v1281 = vmul.f32 %v1279, %v216
    %v1282 = vadd.f32 %v1280, 1e-05
    %v1283 = vadd.f32 %v1281, 1e-05
    %v1284 = vrsqrt.pop %v1282
    %v1285 = vmul.f32 %v1284, %v1282
    %v1286 = vmul.f32 %v1285, %v1284
    %v1287 = vmul.f32 0.5, %v1286
    %v1288 = vsub.f32 1.5, %v1287
    %v1289 = vmul.f32 %v1284, %v1288
    %vm1290 = vweird.f32 %v1282
    %vm1291 = vweird.f32 %v1284
    %vm1292 = vmor %vm1290, %vm1291
    %v1293 = vsel %vm1292, %v1284, %v1289
    %v1294 = vrsqrt.pop %v1283
    %v1295 = vmul.f32 %v1294, %v1283
    %v1296 = vmul.f32 %v1295, %v1294
    %v1297 = vmul.f32 0.5, %v1296
    %v1298 = vsub.f32 1.5, %v1297
    %v1299 = vmul.f32 %v1294, %v1298
    %vm1300 = vweird.f32 %v1283
    %vm1301 = vweird.f32 %v1294
    %vm1302 = vmor %vm1300, %vm1301
    %v1303 = vsel %vm1302, %v1294, %v1299
    %v1304 = vmul.f32 %v1270, %v1293
    %v1305 = vmul.f32 %v1271, %v1303
    %v1306 = vperm.slane %v829, 0
    %v1307 = vmul.f32 %v1304, %v1306
    %v1308 = vmul.f32 %v1305, %v1306
    %v1309 = vperm.slane %v830, 0
    %v1310 = vadd.f32 %v1307, %v1309
    %v1311 = vadd.f32 %v1308, %v1309
    %v1312 = vpack.c.bf16 %v1311, %v1310
    %s1313 = scalar_lea.vmem %s5, 16
    %v1314 = vld [vmem:[%s1313] sm:$0xf]
    %v1315 = vld [vmem:[%s1313 + $0x4] sm:$0xf]
    %v1316 = vld [vmem:[%s1313 + $0x8] sm:$0xf]
    %v1317 = vld [vmem:[%s1313 + $0xc] sm:$0xf]
    %v1318 = vperm.slane %v833, 0
    %v1323 = vunpack.c.l.b16 %v1314
    %v1324 = vunpack.c.l.b16 %v1315
    %v1325 = vunpack.c.l.b16 %v1316
    %v1326 = vunpack.c.l.b16 %v1317
    %v1327 = vpack.c.b16 %v1324, %v1323
    %v1328 = vpack.c.b16 %v1326, %v1325
    %v1332 = vsel %vm203, %v1312, 0
    %1334 = vmatpush.bf16.msra.mxu0 0
    %1335 = vmatpush.bf16.msra.mxu0 0
    %1336 = vmatpush.bf16.msra.mxu0 0
    %1337 = vmatpush.bf16.msra.mxu0 0
    %1338 = vmatpush.bf16.msra.mxu0 0
    %1339 = vmatpush.bf16.msra.mxu0 0
    %1340 = vmatpush.bf16.msra.mxu0 %v1328
    %1341 = vmatpush.bf16.msra.mxu0 %v1327
    %1342 = vmatmul.bf16.gmra.mxu0 %v1332
    %v1343 = vpop.f32.mrf.mxu0
    %v1344 = vadd.f32 %v1318, %v1343
    %v1345 = vpop.f32.mrf.mxu0
    %v1346 = vadd.f32 %v1318, %v1345
    %1347 = vdwg.mxu0
    %v1348 = vmul.f32 %v1344, %v1344
    %v1349 = vmul.f32 %v1346, %v1346
    %v1350 = vmul.f32 %v1344, %v1348
    %v1351 = vmul.f32 %v1346, %v1349
    %v1352 = vmul.f32 %v1350, 0.044715
    %v1353 = vmul.f32 %v1351, 0.044715
    %v1354 = vadd.f32 %v1344, %v1352
    %v1355 = vadd.f32 %v1346, %v1353
    %v1356 = vmul.f32 %v1354, 0.7978846
    %v1357 = vmul.f32 %v1355, 0.7978846
    %v1358 = vtanh.pop %v1356
    %v1359 = vtanh.pop %v1357
    %v1360 = vadd.f32 %v1358, 1.0
    %v1361 = vadd.f32 %v1359, 1.0
    %v1362 = vmul.f32 %v1360, 0.5
    %v1363 = vmul.f32 %v1361, 0.5
    %v1364 = vmul.f32 %v1344, %v1362
    %v1365 = vmul.f32 %v1346, %v1363
    %v1366 = vpack.c.bf16 %v1365, %v1364
    %s1367 = scalar_lea.vmem %s6, 64
    %v1368 = vld [vmem:[%s1367] sm:$0xf]
    %v1369 = vld [vmem:[%s1367 + $0x4] sm:$0xf]
    %v1370 = vld [vmem:[%s1367 + $0x8] sm:$0xf]
    %v1371 = vld [vmem:[%s1367 + $0xc] sm:$0xf]
    %v1372 = vld [vmem:[%s1367 + $0x10] sm:$0xf]
    %v1373 = vld [vmem:[%s1367 + $0x14] sm:$0xf]
    %v1374 = vld [vmem:[%s1367 + $0x18] sm:$0xf]
    %v1375 = vld [vmem:[%s1367 + $0x1c] sm:$0xf]
    %v1376 = vld [vmem:[%s1367 + $0x20] sm:$0xf]
    %v1377 = vld [vmem:[%s1367 + $0x24] sm:$0xf]
    %v1378 = vld [vmem:[%s1367 + $0x28] sm:$0xf]
    %v1379 = vld [vmem:[%s1367 + $0x2c] sm:$0xf]
    %v1380 = vld [vmem:[%s1367 + $0x30] sm:$0xf]
    %v1381 = vld [vmem:[%s1367 + $0x34] sm:$0xf]
    %v1382 = vld [vmem:[%s1367 + $0x38] sm:$0xf]
    %v1383 = vld [vmem:[%s1367 + $0x3c] sm:$0xf]
    %v1400 = vunpack.c.l.b16 %v1368
    %v1401 = vunpack.c.l.b16 %v1369
    %v1402 = vunpack.c.l.b16 %v1370
    %v1403 = vunpack.c.l.b16 %v1371
    %v1404 = vunpack.c.l.b16 %v1372
    %v1405 = vunpack.c.l.b16 %v1373
    %v1406 = vunpack.c.l.b16 %v1374
    %v1407 = vunpack.c.l.b16 %v1375
    %v1408 = vunpack.c.l.b16 %v1376
    %v1409 = vunpack.c.l.b16 %v1377
    %v1410 = vunpack.c.l.b16 %v1378
    %v1411 = vunpack.c.l.b16 %v1379
    %v1412 = vunpack.c.l.b16 %v1380
    %v1413 = vunpack.c.l.b16 %v1381
    %v1414 = vunpack.c.l.b16 %v1382
    %v1415 = vunpack.c.l.b16 %v1383
    %v1416 = vpack.c.b16 %v1401, %v1400
    %v1417 = vpack.c.b16 %v1403, %v1402
    %v1418 = vpack.c.b16 %v1405, %v1404
    %v1419 = vpack.c.b16 %v1407, %v1406
    %v1420 = vpack.c.b16 %v1409, %v1408
    %v1421 = vpack.c.b16 %v1411, %v1410
    %v1422 = vpack.c.b16 %v1413, %v1412
    %v1423 = vpack.c.b16 %v1415, %v1414
    %1432 = vmatpush.bf16.msra.mxu0 %v1423
    %1433 = vmatpush.bf16.msra.mxu0 %v1422
    %1434 = vmatpush.bf16.msra.mxu0 %v1421
    %1435 = vmatpush.bf16.msra.mxu0 %v1420
    %1436 = vmatpush.bf16.msra.mxu0 %v1419
    %1437 = vmatpush.bf16.msra.mxu0 %v1418
    %1438 = vmatpush.bf16.msra.mxu0 %v1417
    %1439 = vmatpush.bf16.msra.mxu0 %v1416
    %1440 = vmatmul.bf16.gmra.mxu0 %v1366
    %v1441 = vpop.f32.mrf.mxu0
    %v1442 = vadd.f32 0.0, %v1441
    %v1443 = vpop.f32.mrf.mxu0
    %v1444 = vadd.f32 0.0, %v1443
    %1445 = vdwg.mxu0
    %v1446 = vadd.f32 %v1260, %v1442
    %v1447 = vadd.f32 %v1261, %v1444
    %v1448 = vperm.slane %v832, 0
    %v1449 = vadd.f32 %v1446, %v1448
    %v1450 = vadd.f32 %v1447, %v1448
    %v1451 = vld [vmem:[%s8 + $0xe] sm:$0x1]
    %v1452 = vld [vmem:[%s8 + $0xf] sm:$0x1]
    %v1453 = vld [vmem:[%s8 + $0x10] sm:$0x1]
    %v1454 = vsel %vm203, %v1449, 0.0
    %1455 = vadd.xlane.f32.xlu0 %v1454
    %v1456 = vpop.xlane.xlu0 %1455
    %v1457 = vsel %vm203, %v1450, 0.0
    %1458 = vadd.xlane.f32.xlu0 %v1457
    %v1459 = vpop.xlane.xlu0 %1458
    %v1460 = vmul.f32 %v1456, %v216
    %v1461 = vmul.f32 %v1459, %v216
    %v1462 = vsub.f32 %v1449, %v1460
    %v1463 = vsub.f32 %v1450, %v1461
    %v1464 = vmul.f32 %v1462, %v1462
    %v1465 = vmul.f32 %v1463, %v1463
    %v1466 = vsel %vm203, %v1464, 0.0
    %1467 = vadd.xlane.f32.xlu0 %v1466
    %v1468 = vpop.xlane.xlu0 %1467
    %v1469 = vsel %vm203, %v1465, 0.0
    %1470 = vadd.xlane.f32.xlu0 %v1469
    %v1471 = vpop.xlane.xlu0 %1470
    %v1472 = vmul.f32 %v1468, %v216
    %v1473 = vmul.f32 %v1471, %v216
    %v1474 = vadd.f32 %v1472, 1e-05
    %v1475 = vadd.f32 %v1473, 1e-05
    %v1476 = vrsqrt.pop %v1474
    %v1477 = vmul.f32 %v1476, %v1474
    %v1478 = vmul.f32 %v1477, %v1476
    %v1479 = vmul.f32 0.5, %v1478
    %v1480 = vsub.f32 1.5, %v1479
    %v1481 = vmul.f32 %v1476, %v1480
    %vm1482 = vweird.f32 %v1474
    %vm1483 = vweird.f32 %v1476
    %vm1484 = vmor %vm1482, %vm1483
    %v1485 = vsel %vm1484, %v1476, %v1481
    %v1486 = vrsqrt.pop %v1475
    %v1487 = vmul.f32 %v1486, %v1475
    %v1488 = vmul.f32 %v1487, %v1486
    %v1489 = vmul.f32 0.5, %v1488
    %v1490 = vsub.f32 1.5, %v1489
    %v1491 = vmul.f32 %v1486, %v1490
    %vm1492 = vweird.f32 %v1475
    %vm1493 = vweird.f32 %v1486
    %vm1494 = vmor %vm1492, %vm1493
    %v1495 = vsel %vm1494, %v1486, %v1491
    %v1496 = vmul.f32 %v1462, %v1485
    %v1497 = vmul.f32 %v1463, %v1495
    %v1498 = vperm.slane %v1451, 0
    %v1499 = vmul.f32 %v1496, %v1498
    %v1500 = vmul.f32 %v1497, %v1498
    %v1501 = vperm.slane %v1452, 0
    %v1502 = vadd.f32 %v1499, %v1501
    %v1503 = vadd.f32 %v1500, %v1501
    %v1504 = vld [vmem:[%s7] sm:$0xff]
    %v1505 = vld [vmem:[%s7 + $0x8] sm:$0xff]
    %v1506 = vld [vmem:[%s7 + $0x10] sm:$0xff]
    %v1507 = vld [vmem:[%s7 + $0x18] sm:$0xff]
    %v1508 = vperm.slane %v1453, 0
    %v1510 = vsel %vm203, %v1502, 0
    %v1513 = vsel %vm203, %v1503, 0
    %1515 = vmatpush.msra.mxu0 0.0
    %1516 = vmatpush.msra.mxu0 0.0
    %1517 = vmatpush.msra.mxu0 0.0
    %1518 = vmatpush.msra.mxu0 0.0
    %1519 = vmatpush.msra.mxu0 0.0
    %1520 = vmatpush.msra.mxu0 0.0
    %1521 = vmatpush.msra.mxu0 0.0
    %1522 = vmatpush.msra.mxu0 0.0
    %1523 = vmatpush.msra.mxu0 0.0
    %1524 = vmatpush.msra.mxu0 0.0
    %1525 = vmatpush.msra.mxu0 0.0
    %1526 = vmatpush.msra.mxu0 0.0
    %1527 = vmatpush.msra.mxu0 %v1507
    %1528 = vmatpush.msra.mxu0 %v1506
    %1529 = vmatpush.msra.mxu0 %v1505
    %1530 = vmatpush.msra.mxu0 %v1504
    %1531 = vmatmul.f32.gmra.mxu0 %v1510
    %v1532 = vpop.f32.mrf.mxu0
    %v1533 = vadd.f32 %v1508, %v1532
    %1534 = vmatmul.f32.gmra.mxu0 %v1513
    %v1535 = vpop.f32.mrf.mxu0
    %1536 = vdwg.mxu0
    %vm1537 = vcmask 73728
    %1538 = vst.msk [vmem:[#allocation2] sm:$0x1] %vm1537, %v1533
    %vm1539 = vcmask 78853
    %1540 = vst.msk [vmem:[#allocation2 - $0x4] sm:$0x20] %vm1539, %v1533
    // Predicated region
    $region38: #{vit_forward_pallas.1} parent=1 // pred_check
      _
    $region39: #{vit_forward_pallas.1} parent=1 // pred_check_branch
      %1542 = sbr.rel (0) target = $region41
    $region40: #{vit_forward_pallas.1} parent=1 // pred_region
      %1544 = vsyncadd [#allocation3], 0
      %s1546 = sshll.u32 [#allocation2], 4
      %s1547 = int_to_ptr.vmem [resolvable:$true] %s1546
      %s1548 = sshll.u32 %s9, 4
      %s1549 = int_to_ptr.hbm [resolvable:$true] %s1548
      %1551 = dma.vmem_to_hbm [thread:$0]  %s1547, 32, %s1549, [#allocation3]
    $region41: #{vit_forward_pallas.1} parent=1 // pred_fallthru
      _
    // Predicated region
    $region42: #{vit_forward_pallas.1} parent=1 // pred_check
      _
    $region43: #{vit_forward_pallas.1} parent=1 // pred_check_branch
      %1553 = sbr.rel (0) target = $region45
    $region44: #{vit_forward_pallas.1} parent=1 // pred_region
      %1555 = dma.done [#allocation3], 32
    $region45: #{vit_forward_pallas.1} parent=1 // pred_fallthru
      _
    %1556 = vsyncpa [#allocation3], 1

</llo_original>
